<compile_context>
chip_gen: v5e
topology: v5e:2x2
jax: 0.10.0
libtpu: 0.0.40
codegen_flags: <defaults>
</compile_context>

<pallas_src>
import jax
import jax.numpy as jnp
from jax.experimental import pallas as pl
from jax.experimental.pallas import tpu as pltpu

LATENT_DIM = 100
LATENT_PAD = 128          # lane-aligned K for the first matmul
H1, H2 = 256, 512
OUT = 784                 # 1*28*28
OUT_PAD = 896             # 7*128 -> lane-dense, unmasked output stores
TILE_B_MAX = 1024         # sweepable batch-tile cap (fits all of v5e/v6e/v7x)


def _round_up(x, m):
    return ((x + m - 1) // m) * m


def _cdiv(a, b):
    return -(-a // b)


def _generator_kernel(z_ref, w1_ref, b1_ref, w2_ref, b2_ref, w3_ref, b3_ref,
                      out_ref):
    # z tile: (TILE_B, 128) bf16 (padded + cast in the wrapper).  Weights are
    # bf16 and VMEM-resident across the whole grid (constant index_map).
    z = z_ref[...]

    # Linear(128 -> 256) + ReLU  (bf16 operands, f32 MXU accumulation)
    h1 = jnp.dot(z, w1_ref[...], preferred_element_type=jnp.float32)
    h1 = jnp.maximum(h1 + b1_ref[...], 0.0)

    # Linear(256 -> 512) + ReLU
    h2 = jnp.dot(h1.astype(jnp.bfloat16), w2_ref[...],
                 preferred_element_type=jnp.float32)
    h2 = jnp.maximum(h2 + b2_ref[...], 0.0)

    # Linear(512 -> 896) + Tanh.  Columns >= 784 have zero weight / zero bias,
    # so they produce tanh(0) = 0 and are sliced off in the wrapper.
    h3 = jnp.dot(h2.astype(jnp.bfloat16), w3_ref[...],
                 preferred_element_type=jnp.float32)
    out_ref[...] = jnp.tanh(h3 + b3_ref[...]).astype(out_ref.dtype)


def prepare_params(params):
    """One-time prep: pad to lane-aligned shapes, cast weights to bf16."""
    w1, b1, w2, b2, w3, b3 = params
    w1p = (jnp.zeros((LATENT_PAD, H1), jnp.bfloat16)
           .at[:LATENT_DIM, :].set(w1.astype(jnp.bfloat16)))
    w3p = (jnp.zeros((H2, OUT_PAD), jnp.bfloat16)
           .at[:, :OUT].set(w3.astype(jnp.bfloat16)))
    b3p = (jnp.zeros((1, OUT_PAD), jnp.float32)
           .at[:, :OUT].set(b3.astype(jnp.float32)))
    return (w1p, b1.astype(jnp.float32),
            w2.astype(jnp.bfloat16), b2.astype(jnp.float32),
            w3p, b3p)


def _choose_tile(B, tb_max):
    """Adaptive batch tiling.

    - cap the tile at tb_max (big tiles amortize per-step overhead),
    - pick the number of chunks so the last tile is mostly full,
    - force >= 2 chunks when B >= 16 so the 'parallel' batch axis splits
      across both TensorCores on v7x (harmless no-op on v5e/v6e).
    """
    n_chunks = max(1, _cdiv(B, tb_max))
    if B >= 16 and n_chunks < 2:
        n_chunks = 2
    tile_b = _round_up(_cdiv(B, n_chunks), 8)   # sublane-aligned
    b_pad = tile_b * n_chunks
    return tile_b, b_pad, n_chunks


def generator_forward_flat(z, prepared_params, *, tile_b_max=TILE_B_MAX):
    """z: (B, LATENT_DIM) -> (b_pad, OUT_PAD) bf16 padded/flat images.

    Cheapest form (no slice/reshape copy of the largest tensor); use
    `generator_forward` for the PyTorch-parity (B, 1, 28, 28) f32 view.
    """
    w1, b1, w2, b2, w3, b3 = prepared_params
    B = z.shape[0]
    tile_b, b_pad, grid_b = _choose_tile(B, tile_b_max)

    # Zero-pad batch (to tile multiple) and latent (100 -> 128 lanes), cast to
    # bf16 on the host side so the per-step z DMA is half width.
    z_pad = (jnp.zeros((b_pad, LATENT_PAD), jnp.bfloat16)
             .at[:B, :LATENT_DIM].set(z.astype(jnp.bfloat16)))

    # Weights / biases: full-array blocks, same block every step -> resident.
    # Constant-index blocks don't need double buffering.
    def resident(a):
        return pl.BlockSpec(a.shape, lambda i: (0,) * a.ndim,
                            pipeline_mode=pl.Buffered(1))

    flops = 2 * b_pad * (LATENT_PAD * H1 + H1 * H2 + H2 * OUT_PAD)
    param_bytes = sum(int(p.size) * p.dtype.itemsize for p in prepared_params)
    bytes_accessed = int(z_pad.size * 2 + param_bytes + b_pad * OUT_PAD * 2)

    img_flat = pl.pallas_call(
        _generator_kernel,
        out_shape=jax.ShapeDtypeStruct((b_pad, OUT_PAD), jnp.bfloat16),
        grid_spec=pltpu.PrefetchScalarGridSpec(
            num_scalar_prefetch=0,
            grid=(grid_b,),
            in_specs=[
                pl.BlockSpec((tile_b, LATENT_PAD), lambda i: (i, 0)),
                resident(w1), resident(b1),
                resident(w2), resident(b2),
                resident(w3), resident(b3),
            ],
            out_specs=pl.BlockSpec((tile_b, OUT_PAD), lambda i: (i, 0)),
        ),
        compiler_params=pltpu.CompilerParams(
            dimension_semantics=("parallel",),
            vmem_limit_bytes=48 << 20),   # headroom for tile_b sweeps; < v7x 64MiB
        cost_estimate=pl.CostEstimate(
            flops=flops,
            transcendentals=b_pad * OUT_PAD,
            bytes_accessed=bytes_accessed),
    )(z_pad, w1, b1, w2, b2, w3, b3)
    return img_flat


def generator_forward(z, prepared_params, *, tile_b_max=TILE_B_MAX,
                      out_dtype=jnp.float32):
    """z: (B, LATENT_DIM) -> (B, 1, 28, 28) images (PyTorch-parity view)."""
    B = z.shape[0]
    img_flat = generator_forward_flat(z, prepared_params,
                                      tile_b_max=tile_b_max)
    # Drop batch/output padding; PyTorch: img.view(-1, 1, 28, 28) (NCHW).
    return img_flat[:B, :OUT].reshape(B, 1, 28, 28).astype(out_dtype)


def init_params(key):
    """Deterministic synthetic parameters matching the nn.Linear shapes.

    Weights are stored (in, out) (transposed vs. PyTorch) so the kernel uses
    `x @ W` directly; biases are (1, out) for TPU-friendly 2-D layouts.
    """
    ks = jax.random.split(key, 6)

    def lin(kw, kb, fan_in, fan_out):
        bound = 1.0 / jnp.sqrt(fan_in)
        w = jax.random.uniform(kw, (fan_in, fan_out), jnp.float32, -bound, bound)
        b = jax.random.uniform(kb, (1, fan_out), jnp.float32, -bound, bound)
        return w, b

    w1, b1 = lin(ks[0], ks[1], LATENT_DIM, H1)
    w2, b2 = lin(ks[2], ks[3], H1, H2)
    w3, b3 = lin(ks[4], ks[5], H2, OUT)
    return (w1, b1, w2, b2, w3, b3)


def _reference_forward_f32(z, params):
    """Full-f32 reference (matches the PyTorch module up to bf16 rounding)."""
    w1, b1, w2, b2, w3, b3 = params
    h1 = jnp.maximum(z @ w1 + b1, 0.0)
    h2 = jnp.maximum(h1 @ w2 + b2, 0.0)
    return jnp.tanh(h2 @ w3 + b3).reshape(-1, 1, 28, 28)


def _reference_forward_bf16(z, prepared_params):
    """Reference using the same bf16-weight / f32-accumulate / bf16-store recipe."""
    w1, b1, w2, b2, w3, b3 = prepared_params
    B = z.shape[0]
    zp = (jnp.zeros((B, LATENT_PAD), jnp.bfloat16)
          .at[:, :LATENT_DIM].set(z.astype(jnp.bfloat16)))
    h1 = jnp.maximum(
        jnp.dot(zp, w1, preferred_element_type=jnp.float32) + b1, 0.0)
    h2 = jnp.maximum(
        jnp.dot(h1.astype(jnp.bfloat16), w2,
                preferred_element_type=jnp.float32) + b2, 0.0)
    h3 = jnp.dot(h2.astype(jnp.bfloat16), w3,
                 preferred_element_type=jnp.float32) + b3
    out = jnp.tanh(h3).astype(jnp.bfloat16)
    return out[:, :OUT].reshape(B, 1, 28, 28).astype(jnp.float32)


if __name__ == "__main__":
    key = jax.random.PRNGKey(0)
    k_param, k_z = jax.random.split(key)

    B = 8  # small batch
    params = init_params(k_param)
    prepared = prepare_params(params)
    z = jax.random.normal(k_z, (B, LATENT_DIM), dtype=jnp.float32)

    img = generator_forward(z, prepared)
    img = jax.block_until_ready(img)

    assert img.shape == (B, 1, 28, 28), img.shape
    assert img.dtype == jnp.float32

    # Check against a reference using the same bf16 numeric recipe
    # (bf16 output store -> ~4e-3 quantization of tanh values in [-1, 1]).
    ref_bf16 = jax.block_until_ready(_reference_forward_bf16(z, prepared))
    assert jnp.allclose(img, ref_bf16, atol=1e-2, rtol=1e-2)

    # Looser check against the full-f32 PyTorch-equivalent reference
    # (difference is only bf16 weight/activation/output rounding).
    ref_f32 = jax.block_until_ready(_reference_forward_f32(z, params))
    assert jnp.allclose(img, ref_f32, atol=6e-2, rtol=6e-2)

    print("KERNEL_OK")
</pallas_src>

<mosaic_0001>
module attributes {stable_mosaic.version = 11 : i64} {
  func.func @_generator_kernel(%arg0: i32, %arg1: memref<8x128xbf16, #tpu.memory_space<vmem>>, %arg2: memref<128x256xbf16, #tpu.memory_space<vmem>>, %arg3: memref<1x256xf32, #tpu.memory_space<vmem>>, %arg4: memref<256x512xbf16, #tpu.memory_space<vmem>>, %arg5: memref<1x512xf32, #tpu.memory_space<vmem>>, %arg6: memref<512x896xbf16, #tpu.memory_space<vmem>>, %arg7: memref<1x896xf32, #tpu.memory_space<vmem>>, %arg8: memref<8x896xbf16, #tpu.memory_space<vmem>>) attributes {dimension_semantics = [#tpu.dimension_semantics<parallel>], iteration_bounds = array<i64: 1>, scalar_prefetch = 0 : i64, scratch_operands = 0 : i64, tpu.core_type = #tpu.core_type<tc>, window_params = [{transform_indices = @transform_0, window_bounds = array<i64: 8, 128>}, {pipeline_mode = #tpu.pipeline_mode<synchronous>, transform_indices = @transform_1, window_bounds = array<i64: 128, 256>}, {pipeline_mode = #tpu.pipeline_mode<synchronous>, transform_indices = @transform_2, window_bounds = array<i64: 1, 256>}, {pipeline_mode = #tpu.pipeline_mode<synchronous>, transform_indices = @transform_3, window_bounds = array<i64: 256, 512>}, {pipeline_mode = #tpu.pipeline_mode<synchronous>, transform_indices = @transform_4, window_bounds = array<i64: 1, 512>}, {pipeline_mode = #tpu.pipeline_mode<synchronous>, transform_indices = @transform_5, window_bounds = array<i64: 512, 896>}, {pipeline_mode = #tpu.pipeline_mode<synchronous>, transform_indices = @transform_6, window_bounds = array<i64: 1, 896>}, {transform_indices = @transform_7, window_bounds = array<i64: 8, 896>}]} {
    %c0 = arith.constant 0 : index
    %c0_0 = arith.constant 0 : index
    %0 = vector.load %arg1[%c0, %c0_0] : memref<8x128xbf16, #tpu.memory_space<vmem>>, vector<8x128xbf16>
    %c0_1 = arith.constant 0 : index
    %c0_2 = arith.constant 0 : index
    %1 = vector.load %arg2[%c0_1, %c0_2] : memref<128x256xbf16, #tpu.memory_space<vmem>>, vector<128x256xbf16>
    %cst = arith.constant dense<0.000000e+00> : vector<8x256xf32>
    %2 = tpu.matmul %0, %1, %cst {dimension_numbers = #tpu.dot_dimension_numbers<[1], [0], [0], [1], [0, 0, 1, 1], [], []>} : vector<8x128xbf16>, vector<128x256xbf16>, vector<8x256xf32> -> vector<8x256xf32>
    %c0_3 = arith.constant 0 : index
    %c0_4 = arith.constant 0 : index
    %3 = vector.load %arg3[%c0_3, %c0_4] : memref<1x256xf32, #tpu.memory_space<vmem>>, vector<1x256xf32>
    %4 = vector.broadcast %3 : vector<1x256xf32> to vector<8x256xf32>
    %5 = arith.addf %2, %4 : vector<8x256xf32>
    %cst_5 = arith.constant 0.000000e+00 : f32
    %6 = vector.broadcast %cst_5 : f32 to vector<8x256xf32>
    %7 = arith.maximumf %5, %6 : vector<8x256xf32>
    %8 = arith.truncf %7 : vector<8x256xf32> to vector<8x256xbf16>
    %c0_6 = arith.constant 0 : index
    %c0_7 = arith.constant 0 : index
    %9 = vector.load %arg4[%c0_6, %c0_7] : memref<256x512xbf16, #tpu.memory_space<vmem>>, vector<256x512xbf16>
    %cst_8 = arith.constant dense<0.000000e+00> : vector<8x512xf32>
    %10 = tpu.matmul %8, %9, %cst_8 {dimension_numbers = #tpu.dot_dimension_numbers<[1], [0], [0], [1], [0, 0, 1, 1], [], []>} : vector<8x256xbf16>, vector<256x512xbf16>, vector<8x512xf32> -> vector<8x512xf32>
    %c0_9 = arith.constant 0 : index
    %c0_10 = arith.constant 0 : index
    %11 = vector.load %arg5[%c0_9, %c0_10] : memref<1x512xf32, #tpu.memory_space<vmem>>, vector<1x512xf32>
    %12 = vector.broadcast %11 : vector<1x512xf32> to vector<8x512xf32>
    %13 = arith.addf %10, %12 : vector<8x512xf32>
    %cst_11 = arith.constant 0.000000e+00 : f32
    %14 = vector.broadcast %cst_11 : f32 to vector<8x512xf32>
    %15 = arith.maximumf %13, %14 : vector<8x512xf32>
    %16 = arith.truncf %15 : vector<8x512xf32> to vector<8x512xbf16>
    %c0_12 = arith.constant 0 : index
    %c0_13 = arith.constant 0 : index
    %17 = vector.load %arg6[%c0_12, %c0_13] : memref<512x896xbf16, #tpu.memory_space<vmem>>, vector<512x896xbf16>
    %cst_14 = arith.constant dense<0.000000e+00> : vector<8x896xf32>
    %18 = tpu.matmul %16, %17, %cst_14 {dimension_numbers = #tpu.dot_dimension_numbers<[1], [0], [0], [1], [0, 0, 1, 1], [], []>} : vector<8x512xbf16>, vector<512x896xbf16>, vector<8x896xf32> -> vector<8x896xf32>
    %c0_15 = arith.constant 0 : index
    %c0_16 = arith.constant 0 : index
    %19 = vector.load %arg7[%c0_15, %c0_16] : memref<1x896xf32, #tpu.memory_space<vmem>>, vector<1x896xf32>
    %20 = vector.broadcast %19 : vector<1x896xf32> to vector<8x896xf32>
    %21 = arith.addf %18, %20 : vector<8x896xf32>
    %22 = math.tanh %21 : vector<8x896xf32>
    %23 = arith.truncf %22 : vector<8x896xf32> to vector<8x896xbf16>
    %c0_17 = arith.constant 0 : index
    %c0_18 = arith.constant 0 : index
    %24 = vector.load %arg8[%c0_17, %c0_18] : memref<8x896xbf16, #tpu.memory_space<vmem>>, vector<8x896xbf16>
    tpu.vector_store %arg8[%c0_17, %c0_18], %23 {strides = array<i32>} : memref<8x896xbf16, #tpu.memory_space<vmem>>, vector<8x896xbf16>,
    return
  }
  func.func @transform_0(%arg0: i32) -> (i32, i32) {
    %c0_i32 = arith.constant 0 : i32
    %c0_i32_0 = arith.constant 0 : i32
    return %arg0, %c0_i32 : i32, i32
  }
  func.func @transform_1(%arg0: i32) -> (i32, i32) {
    %c0_i32 = arith.constant 0 : i32
    %c0_i32_0 = arith.constant 0 : i32
    %c0_i32_1 = arith.constant 0 : i32
    return %c0_i32, %c0_i32_0 : i32, i32
  }
  func.func @transform_2(%arg0: i32) -> (i32, i32) {
    %c0_i32 = arith.constant 0 : i32
    %c0_i32_0 = arith.constant 0 : i32
    %c0_i32_1 = arith.constant 0 : i32
    return %c0_i32, %c0_i32_0 : i32, i32
  }
  func.func @transform_3(%arg0: i32) -> (i32, i32) {
    %c0_i32 = arith.constant 0 : i32
    %c0_i32_0 = arith.constant 0 : i32
    %c0_i32_1 = arith.constant 0 : i32
    return %c0_i32, %c0_i32_0 : i32, i32
  }
  func.func @transform_4(%arg0: i32) -> (i32, i32) {
    %c0_i32 = arith.constant 0 : i32
    %c0_i32_0 = arith.constant 0 : i32
    %c0_i32_1 = arith.constant 0 : i32
    return %c0_i32, %c0_i32_0 : i32, i32
  }
  func.func @transform_5(%arg0: i32) -> (i32, i32) {
    %c0_i32 = arith.constant 0 : i32
    %c0_i32_0 = arith.constant 0 : i32
    %c0_i32_1 = arith.constant 0 : i32
    return %c0_i32, %c0_i32_0 : i32, i32
  }
  func.func @transform_6(%arg0: i32) -> (i32, i32) {
    %c0_i32 = arith.constant 0 : i32
    %c0_i32_0 = arith.constant 0 : i32
    %c0_i32_1 = arith.constant 0 : i32
    return %c0_i32, %c0_i32_0 : i32, i32
  }
  func.func @transform_7(%arg0: i32) -> (i32, i32) {
    %c0_i32 = arith.constant 0 : i32
    %c0_i32_0 = arith.constant 0 : i32
    return %arg0, %c0_i32 : i32, i32
  }
}

</mosaic_0001>

<llo_original>
// kernel: tpu_custom_call.1
$region0: #{tpu_custom_call.1}
  #allocation0 [shape = 'u32[]', space=smem, size = 0x4, offset = 0x4, fixed_abs, tag = 'smem constant byte address 0x4 - core index']
  #allocation1 [shape = 'u32[72,128]{1,0:T(1,128)}', space=vmem, size = 0x9000, scoped, tag = 'internal scratch']
  %s0 = inlined_call_operand.hbm [shape: bf16[8,128], index: 0, kind: input, shape index: {}]
  %s1 = inlined_call_operand.hbm [shape: bf16[128,256], index: 1, kind: input, shape index: {}]
  %s2 = inlined_call_operand.hbm [shape: f32[1,256], index: 2, kind: input, shape index: {}]
  %s3 = inlined_call_operand.hbm [shape: bf16[256,512], index: 3, kind: input, shape index: {}]
  %s4 = inlined_call_operand.hbm [shape: f32[1,512], index: 4, kind: input, shape index: {}]
  %s5 = inlined_call_operand.hbm [shape: bf16[512,896], index: 5, kind: input, shape index: {}]
  %s6 = inlined_call_operand.hbm [shape: f32[1,896], index: 6, kind: input, shape index: {}]
  %s7 = inlined_call_operand.hbm [shape: bf16[8,896], index: 7, kind: output, shape index: {}]
  %s8 = sld [smem:[#allocation0]]
  $region66: #{tpu_custom_call.1} parent=0
    _
  %s10 = ssub.s32 1, %s8
  %s11 = scalar_select 0, %s10, %s8
  $region1: #{tpu_custom_call.1} parent=0
    #allocation2 [shape = 'u8[2048]{0}', space=vmem, size = 0x800, scoped, tag = 'input window, operand 0, single buffered']
    #allocation3 [shape = 's32[1]{0}', space=sflag, size = 0x4, scoped, tag = 'scoped memory for tpu_custom_call.1']
    #allocation4 [shape = 's32[1]{0}', space=sflag, size = 0x4, scoped, tag = 'scoped memory for tpu_custom_call.1']
    #allocation5 [shape = 'u8[65536]{0}', space=vmem, size = 0x10000, scoped, tag = 'input window, operand 1, single buffered']
    #allocation6 [shape = 's32[1]{0}', space=sflag, size = 0x4, scoped, tag = 'scoped memory for tpu_custom_call.1']
    #allocation7 [shape = 'u8[1024]{0}', space=vmem, size = 0x400, scoped, tag = 'input window, operand 2, single buffered']
    #allocation8 [shape = 'u8[262144]{0}', space=vmem, size = 0x40000, scoped, tag = 'input window, operand 3, single buffered']
    #allocation9 [shape = 's32[1]{0}', space=sflag, size = 0x4, scoped, tag = 'scoped memory for tpu_custom_call.1']
    #allocation10 [shape = 'u8[2048]{0}', space=vmem, size = 0x800, scoped, tag = 'input window, operand 4, single buffered']
    #allocation11 [shape = 'u8[917504]{0}', space=vmem, size = 0xe0000, scoped, tag = 'input window, operand 5, single buffered']
    #allocation12 [shape = 's32[1]{0}', space=sflag, size = 0x4, scoped, tag = 'scoped memory for tpu_custom_call.1']
    #allocation13 [shape = 'u8[3584]{0}', space=vmem, size = 0x1000, scoped, tag = 'input window, operand 6, single buffered']
    #allocation14 [shape = 'u8[14336]{0}', space=vmem, size = 0x3800, scoped, tag = 'output window, operand 0, single buffered']
    %12 = vsyncpa [#allocation3], 0
    %13 = vsyncpa [#allocation6], 0
    %14 = vsyncpa [#allocation9], 0
    %15 = vsyncpa [#allocation12], 0
    %16 = vsyncpa [#allocation4], 0
    // Predicated region
    $region2: #{tpu_custom_call.1} parent=1 // pred_check
      _
    $region3: #{tpu_custom_call.1} parent=1 // pred_check_branch
      %18 = sbr.rel (0) target = $region5
    $region4: #{tpu_custom_call.1} parent=1 // pred_region
      %20 = vsyncadd [#allocation3], 0
      %s22 = sshll.u32 %s0, 4
      %s23 = int_to_ptr.hbm [resolvable:$true] %s22
      %s24 = sshll.u32 [#allocation2], 4
      %s25 = int_to_ptr.vmem [resolvable:$true] %s24
      %27 = dma.hbm_to_vmem [thread:$0]  %s23, 64, %s25, [#allocation3]
    $region5: #{tpu_custom_call.1} parent=1 // pred_fallthru
      _
    // Predicated region
    $region6: #{tpu_custom_call.1} parent=1 // pred_check
      _
    $region7: #{tpu_custom_call.1} parent=1 // pred_check_branch
      %29 = sbr.rel (0) target = $region9
    $region8: #{tpu_custom_call.1} parent=1 // pred_region
      %31 = vsyncadd [#allocation6], 0
      %s32 = sshll.u32 %s1, 4
      %s33 = int_to_ptr.hbm [resolvable:$true] %s32
      %s34 = sshll.u32 [#allocation5], 4
      %s35 = int_to_ptr.vmem [resolvable:$true] %s34
      %40 = dma.hbm_to_vmem [thread:$0]  %s33, 2048, %s35, [#allocation6], 128, 128, 8
    $region9: #{tpu_custom_call.1} parent=1 // pred_fallthru
      _
    // Predicated region
    $region10: #{tpu_custom_call.1} parent=1 // pred_check
      _
    $region11: #{tpu_custom_call.1} parent=1 // pred_check_branch
      %42 = sbr.rel (0) target = $region13
    $region12: #{tpu_custom_call.1} parent=1 // pred_region
      %44 = vsyncadd [#allocation6], 0
      %s46 = sshll.u32 %s2, 4
      %s47 = int_to_ptr.hbm [resolvable:$true] %s46
      %s48 = sshll.u32 [#allocation7], 4
      %s49 = int_to_ptr.vmem [resolvable:$true] %s48
      %51 = dma.hbm_to_vmem [thread:$0]  %s47, 32, %s49, [#allocation6]
    $region13: #{tpu_custom_call.1} parent=1 // pred_fallthru
      _
    // Predicated region
    $region14: #{tpu_custom_call.1} parent=1 // pred_check
      _
    $region15: #{tpu_custom_call.1} parent=1 // pred_check_branch
      %53 = sbr.rel (0) target = $region17
    $region16: #{tpu_custom_call.1} parent=1 // pred_region
      %55 = vsyncadd [#allocation9], 0
      %s56 = sshll.u32 %s3, 4
      %s57 = int_to_ptr.hbm [resolvable:$true] %s56
      %s58 = sshll.u32 [#allocation8], 4
      %s59 = int_to_ptr.vmem [resolvable:$true] %s58
      %64 = dma.hbm_to_vmem [thread:$0]  %s57, 8192, %s59, [#allocation9], 256, 256, 16
    $region17: #{tpu_custom_call.1} parent=1 // pred_fallthru
      _
    // Predicated region
    $region18: #{tpu_custom_call.1} parent=1 // pred_check
      _
    $region19: #{tpu_custom_call.1} parent=1 // pred_check_branch
      %66 = sbr.rel (0) target = $region21
    $region20: #{tpu_custom_call.1} parent=1 // pred_region
      %68 = vsyncadd [#allocation9], 0
      %s70 = sshll.u32 %s4, 4
      %s71 = int_to_ptr.hbm [resolvable:$true] %s70
      %s72 = sshll.u32 [#allocation10], 4
      %s73 = int_to_ptr.vmem [resolvable:$true] %s72
      %75 = dma.hbm_to_vmem [thread:$0]  %s71, 64, %s73, [#allocation9]
    $region21: #{tpu_custom_call.1} parent=1 // pred_fallthru
      _
    // Predicated region
    $region22: #{tpu_custom_call.1} parent=1 // pred_check
      _
    $region23: #{tpu_custom_call.1} parent=1 // pred_check_branch
      %77 = sbr.rel (0) target = $region25
    $region24: #{tpu_custom_call.1} parent=1 // pred_region
      %79 = vsyncadd [#allocation12], 0
      %s80 = sshll.u32 %s5, 4
      %s81 = int_to_ptr.hbm [resolvable:$true] %s80
      %s82 = sshll.u32 [#allocation11], 4
      %s83 = int_to_ptr.vmem [resolvable:$true] %s82
      %88 = dma.hbm_to_vmem [thread:$0]  %s81, 28672, %s83, [#allocation12], 448, 448, 28
    $region25: #{tpu_custom_call.1} parent=1 // pred_fallthru
      _
    // Predicated region
    $region26: #{tpu_custom_call.1} parent=1 // pred_check
      _
    $region27: #{tpu_custom_call.1} parent=1 // pred_check_branch
      %90 = sbr.rel (0) target = $region29
    $region28: #{tpu_custom_call.1} parent=1 // pred_region
      %92 = vsyncadd [#allocation12], 0
      %s94 = sshll.u32 %s6, 4
      %s95 = int_to_ptr.hbm [resolvable:$true] %s94
      %s96 = sshll.u32 [#allocation13], 4
      %s97 = int_to_ptr.vmem [resolvable:$true] %s96
      %99 = dma.hbm_to_vmem [thread:$0]  %s95, 112, %s97, [#allocation12]
    $region29: #{tpu_custom_call.1} parent=1 // pred_fallthru
      _
    // Predicated region
    $region30: #{tpu_custom_call.1} parent=1 // pred_check
      _
    $region31: #{tpu_custom_call.1} parent=1 // pred_check_branch
      %101 = sbr.rel (0) target = $region33
    $region32: #{tpu_custom_call.1} parent=1 // pred_region
      %103 = dma.done [#allocation3], 64
    $region33: #{tpu_custom_call.1} parent=1 // pred_fallthru
      _
    // Predicated region
    $region34: #{tpu_custom_call.1} parent=1 // pred_check
      _
    $region35: #{tpu_custom_call.1} parent=1 // pred_check_branch
      %105 = sbr.rel (0) target = $region37
    $region36: #{tpu_custom_call.1} parent=1 // pred_region
      %107 = dma.done [#allocation6], 2048
    $region37: #{tpu_custom_call.1} parent=1 // pred_fallthru
      _
    // Predicated region
    $region38: #{tpu_custom_call.1} parent=1 // pred_check
      _
    $region39: #{tpu_custom_call.1} parent=1 // pred_check_branch
      %109 = sbr.rel (0) target = $region41
    $region40: #{tpu_custom_call.1} parent=1 // pred_region
      %111 = dma.done [#allocation6], 32
    $region41: #{tpu_custom_call.1} parent=1 // pred_fallthru
      _
    // Predicated region
    $region42: #{tpu_custom_call.1} parent=1 // pred_check
      _
    $region43: #{tpu_custom_call.1} parent=1 // pred_check_branch
      %113 = sbr.rel (0) target = $region45
    $region44: #{tpu_custom_call.1} parent=1 // pred_region
      %115 = dma.done [#allocation9], 8192
    $region45: #{tpu_custom_call.1} parent=1 // pred_fallthru
      _
    // Predicated region
    $region46: #{tpu_custom_call.1} parent=1 // pred_check
      _
    $region47: #{tpu_custom_call.1} parent=1 // pred_check_branch
      %117 = sbr.rel (0) target = $region49
    $region48: #{tpu_custom_call.1} parent=1 // pred_region
      %119 = dma.done [#allocation9], 64
    $region49: #{tpu_custom_call.1} parent=1 // pred_fallthru
      _
    // Predicated region
    $region50: #{tpu_custom_call.1} parent=1 // pred_check
      _
    $region51: #{tpu_custom_call.1} parent=1 // pred_check_branch
      %121 = sbr.rel (0) target = $region53
    $region52: #{tpu_custom_call.1} parent=1 // pred_region
      %123 = dma.done [#allocation12], 28672
    $region53: #{tpu_custom_call.1} parent=1 // pred_fallthru
      _
    // Predicated region
    $region54: #{tpu_custom_call.1} parent=1 // pred_check
      _
    $region55: #{tpu_custom_call.1} parent=1 // pred_check_branch
      %125 = sbr.rel (0) target = $region57
    $region56: #{tpu_custom_call.1} parent=1 // pred_region
      %127 = dma.done [#allocation12], 112
    $region57: #{tpu_custom_call.1} parent=1 // pred_fallthru
      _
    %v128 = vld [vmem:[#allocation2] sm:$0xf]
    %v129 = vld [vmem:[#allocation5] sm:$0xff]
    %v130 = vld [vmem:[#allocation5 + $0x8] sm:$0xff]
    %v131 = vld [vmem:[#allocation5 + $0x10] sm:$0xff]
    %v132 = vld [vmem:[#allocation5 + $0x18] sm:$0xff]
    %v133 = vld [vmem:[#allocation5 + $0x20] sm:$0xff]
    %v134 = vld [vmem:[#allocation5 + $0x28] sm:$0xff]
    %v135 = vld [vmem:[#allocation5 + $0x30] sm:$0xff]
    %v136 = vld [vmem:[#allocation5 + $0x38] sm:$0xff]
    %v137 = vld [vmem:[#allocation5 + $0x40] sm:$0xff]
    %v138 = vld [vmem:[#allocation5 + $0x48] sm:$0xff]
    %v139 = vld [vmem:[#allocation5 + $0x50] sm:$0xff]
    %v140 = vld [vmem:[#allocation5 + $0x58] sm:$0xff]
    %v141 = vld [vmem:[#allocation5 + $0x60] sm:$0xff]
    %v142 = vld [vmem:[#allocation5 + $0x68] sm:$0xff]
    %v143 = vld [vmem:[#allocation5 + $0x70] sm:$0xff]
    %v144 = vld [vmem:[#allocation5 + $0x78] sm:$0xff]
    %v145 = vld [vmem:[#allocation7] sm:$0x3]
    %v147 = vperm.slane %v145, 0
    %v148 = vperm.slane %v145, 1
    %v167 = vunpack.c.l.b16 %v129
    %v168 = vunpack.c.h.b16 %v129
    %v169 = vunpack.c.l.b16 %v130
    %v170 = vunpack.c.h.b16 %v130
    %v171 = vunpack.c.l.b16 %v131
    %v172 = vunpack.c.h.b16 %v131
    %v173 = vunpack.c.l.b16 %v132
    %v174 = vunpack.c.h.b16 %v132
    %v175 = vunpack.c.l.b16 %v133
    %v176 = vunpack.c.h.b16 %v133
    %v177 = vunpack.c.l.b16 %v134
    %v178 = vunpack.c.h.b16 %v134
    %v179 = vunpack.c.l.b16 %v135
    %v180 = vunpack.c.h.b16 %v135
    %v181 = vunpack.c.l.b16 %v136
    %v182 = vunpack.c.h.b16 %v136
    %v183 = vunpack.c.l.b16 %v137
    %v184 = vunpack.c.h.b16 %v137
    %v185 = vunpack.c.l.b16 %v138
    %v186 = vunpack.c.h.b16 %v138
    %v187 = vunpack.c.l.b16 %v139
    %v188 = vunpack.c.h.b16 %v139
    %v189 = vunpack.c.l.b16 %v140
    %v190 = vunpack.c.h.b16 %v140
    %v191 = vunpack.c.l.b16 %v141
    %v192 = vunpack.c.h.b16 %v141
    %v193 = vunpack.c.l.b16 %v142
    %v194 = vunpack.c.h.b16 %v142
    %v195 = vunpack.c.l.b16 %v143
    %v196 = vunpack.c.h.b16 %v143
    %v197 = vunpack.c.l.b16 %v144
    %v198 = vunpack.c.h.b16 %v144
    %v199 = vpack.c.b16 %v169, %v167
    %v200 = vpack.c.b16 %v170, %v168
    %v201 = vpack.c.b16 %v173, %v171
    %v202 = vpack.c.b16 %v174, %v172
    %v203 = vpack.c.b16 %v177, %v175
    %v204 = vpack.c.b16 %v178, %v176
    %v205 = vpack.c.b16 %v181, %v179
    %v206 = vpack.c.b16 %v182, %v180
    %v207 = vpack.c.b16 %v185, %v183
    %v208 = vpack.c.b16 %v186, %v184
    %v209 = vpack.c.b16 %v189, %v187
    %v210 = vpack.c.b16 %v190, %v188
    %v211 = vpack.c.b16 %v193, %v191
    %v212 = vpack.c.b16 %v194, %v192
    %v213 = vpack.c.b16 %v197, %v195
    %v214 = vpack.c.b16 %v198, %v196
    %231 = vmatpush.bf16.msra.mxu0 %v213
    %232 = vmatpush.bf16.msra.mxu0 %v211
    %233 = vmatpush.bf16.msra.mxu0 %v209
    %234 = vmatpush.bf16.msra.mxu0 %v207
    %235 = vmatpush.bf16.msra.mxu0 %v205
    %236 = vmatpush.bf16.msra.mxu0 %v203
    %237 = vmatpush.bf16.msra.mxu0 %v201
    %238 = vmatpush.bf16.msra.mxu0 %v199
    %239 = vmatmul.bf16.gmra.mxu0 %v128
    %v240 = vpop.f32.mrf.mxu0
    %v241 = vadd.f32 %v147, %v240
    %v242 = vpop.f32.mrf.mxu0
    %243 = vdwg.mxu0
    %244 = vmatpush.bf16.msra.mxu0 %v214
    %245 = vmatpush.bf16.msra.mxu0 %v212
    %246 = vmatpush.bf16.msra.mxu0 %v210
    %247 = vmatpush.bf16.msra.mxu0 %v208
    %248 = vmatpush.bf16.msra.mxu0 %v206
    %249 = vmatpush.bf16.msra.mxu0 %v204
    %250 = vmatpush.bf16.msra.mxu0 %v202
    %251 = vmatpush.bf16.msra.mxu0 %v200
    %252 = vmatmul.bf16.gmra.mxu0 %v128
    %v253 = vpop.f32.mrf.mxu0
    %v254 = vadd.f32 %v148, %v253
    %v255 = vpop.f32.mrf.mxu0
    %256 = vdwg.mxu0
    %v257 = vmax.f32 %v241, 0.0
    %v258 = vmax.f32 %v254, 0.0
    %v259 = vpack.c.bf16 %v257, %v257
    %v260 = vpack.c.bf16 %v258, %v258
    %v261 = vld [vmem:[#allocation8] sm:$0xff]
    %v262 = vld [vmem:[#allocation8 + $0x8] sm:$0xff]
    %v263 = vld [vmem:[#allocation8 + $0x10] sm:$0xff]
    %v264 = vld [vmem:[#allocation8 + $0x18] sm:$0xff]
    %v265 = vld [vmem:[#allocation8 + $0x20] sm:$0xff]
    %v266 = vld [vmem:[#allocation8 + $0x28] sm:$0xff]
    %v267 = vld [vmem:[#allocation8 + $0x30] sm:$0xff]
    %v268 = vld [vmem:[#allocation8 + $0x38] sm:$0xff]
    %v269 = vld [vmem:[#allocation8 + $0x40] sm:$0xff]
    %v270 = vld [vmem:[#allocation8 + $0x48] sm:$0xff]
    %v271 = vld [vmem:[#allocation8 + $0x50] sm:$0xff]
    %v272 = vld [vmem:[#allocation8 + $0x58] sm:$0xff]
    %v273 = vld [vmem:[#allocation8 + $0x60] sm:$0xff]
    %v274 = vld [vmem:[#allocation8 + $0x68] sm:$0xff]
    %v275 = vld [vmem:[#allocation8 + $0x70] sm:$0xff]
    %v276 = vld [vmem:[#allocation8 + $0x78] sm:$0xff]
    %v277 = vld [vmem:[#allocation8 + $0x80] sm:$0xff]
    %v278 = vld [vmem:[#allocation8 + $0x88] sm:$0xff]
    %v279 = vld [vmem:[#allocation8 + $0x90] sm:$0xff]
    %v280 = vld [vmem:[#allocation8 + $0x98] sm:$0xff]
    %v281 = vld [vmem:[#allocation8 + $0xa0] sm:$0xff]
    %v282 = vld [vmem:[#allocation8 + $0xa8] sm:$0xff]
    %v283 = vld [vmem:[#allocation8 + $0xb0] sm:$0xff]
    %v284 = vld [vmem:[#allocation8 + $0xb8] sm:$0xff]
    %v285 = vld [vmem:[#allocation8 + $0xc0] sm:$0xff]
    %v286 = vld [vmem:[#allocation8 + $0xc8] sm:$0xff]
    %v287 = vld [vmem:[#allocation8 + $0xd0] sm:$0xff]
    %v288 = vld [vmem:[#allocation8 + $0xd8] sm:$0xff]
    %v289 = vld [vmem:[#allocation8 + $0xe0] sm:$0xff]
    %v290 = vld [vmem:[#allocation8 + $0xe8] sm:$0xff]
    %v291 = vld [vmem:[#allocation8 + $0xf0] sm:$0xff]
    %v292 = vld [vmem:[#allocation8 + $0xf8] sm:$0xff]
    %v293 = vld [vmem:[#allocation8 + $0x100] sm:$0xff]
    %v294 = vld [vmem:[#allocation8 + $0x108] sm:$0xff]
    %v295 = vld [vmem:[#allocation8 + $0x110] sm:$0xff]
    %v296 = vld [vmem:[#allocation8 + $0x118] sm:$0xff]
    %v297 = vld [vmem:[#allocation8 + $0x120] sm:$0xff]
    %v298 = vld [vmem:[#allocation8 + $0x128] sm:$0xff]
    %v299 = vld [vmem:[#allocation8 + $0x130] sm:$0xff]
    %v300 = vld [vmem:[#allocation8 + $0x138] sm:$0xff]
    %v301 = vld [vmem:[#allocation8 + $0x140] sm:$0xff]
    %v302 = vld [vmem:[#allocation8 + $0x148] sm:$0xff]
    %v303 = vld [vmem:[#allocation8 + $0x150] sm:$0xff]
    %v304 = vld [vmem:[#allocation8 + $0x158] sm:$0xff]
    %v305 = vld [vmem:[#allocation8 + $0x160] sm:$0xff]
    %v306 = vld [vmem:[#allocation8 + $0x168] sm:$0xff]
    %v307 = vld [vmem:[#allocation8 + $0x170] sm:$0xff]
    %v308 = vld [vmem:[#allocation8 + $0x178] sm:$0xff]
    %v309 = vld [vmem:[#allocation8 + $0x180] sm:$0xff]
    %v310 = vld [vmem:[#allocation8 + $0x188] sm:$0xff]
    %v311 = vld [vmem:[#allocation8 + $0x190] sm:$0xff]
    %v312 = vld [vmem:[#allocation8 + $0x198] sm:$0xff]
    %v313 = vld [vmem:[#allocation8 + $0x1a0] sm:$0xff]
    %v314 = vld [vmem:[#allocation8 + $0x1a8] sm:$0xff]
    %v315 = vld [vmem:[#allocation8 + $0x1b0] sm:$0xff]
    %v316 = vld [vmem:[#allocation8 + $0x1b8] sm:$0xff]
    %v317 = vld [vmem:[#allocation8 + $0x1c0] sm:$0xff]
    %v318 = vld [vmem:[#allocation8 + $0x1c8] sm:$0xff]
    %v319 = vld [vmem:[#allocation8 + $0x1d0] sm:$0xff]
    %v320 = vld [vmem:[#allocation8 + $0x1d8] sm:$0xff]
    %v321 = vld [vmem:[#allocation8 + $0x1e0] sm:$0xff]
    %v322 = vld [vmem:[#allocation8 + $0x1e8] sm:$0xff]
    %v323 = vld [vmem:[#allocation8 + $0x1f0] sm:$0xff]
    %v324 = vld [vmem:[#allocation8 + $0x1f8] sm:$0xff]
    %v325 = vld [vmem:[#allocation10] sm:$0xf]
    %v327 = vperm.slane %v325, 0
    %v328 = vperm.slane %v325, 1
    %v329 = vperm.slane %v325, 2
    %v330 = vperm.slane %v325, 3
    %v399 = vunpack.c.l.b16 %v261
    %v400 = vunpack.c.h.b16 %v261
    %v401 = vunpack.c.l.b16 %v262
    %v402 = vunpack.c.h.b16 %v262
    %v403 = vunpack.c.l.b16 %v263
    %v404 = vunpack.c.h.b16 %v263
    %v405 = vunpack.c.l.b16 %v264
    %v406 = vunpack.c.h.b16 %v264
    %v407 = vunpack.c.l.b16 %v265
    %v408 = vunpack.c.h.b16 %v265
    %v409 = vunpack.c.l.b16 %v266
    %v410 = vunpack.c.h.b16 %v266
    %v411 = vunpack.c.l.b16 %v267
    %v412 = vunpack.c.h.b16 %v267
    %v413 = vunpack.c.l.b16 %v268
    %v414 = vunpack.c.h.b16 %v268
    %v415 = vunpack.c.l.b16 %v269
    %v416 = vunpack.c.h.b16 %v269
    %v417 = vunpack.c.l.b16 %v270
    %v418 = vunpack.c.h.b16 %v270
    %v419 = vunpack.c.l.b16 %v271
    %v420 = vunpack.c.h.b16 %v271
    %v421 = vunpack.c.l.b16 %v272
    %v422 = vunpack.c.h.b16 %v272
    %v423 = vunpack.c.l.b16 %v273
    %v424 = vunpack.c.h.b16 %v273
    %v425 = vunpack.c.l.b16 %v274
    %v426 = vunpack.c.h.b16 %v274
    %v427 = vunpack.c.l.b16 %v275
    %v428 = vunpack.c.h.b16 %v275
    %v429 = vunpack.c.l.b16 %v276
    %v430 = vunpack.c.h.b16 %v276
    %v431 = vunpack.c.l.b16 %v277
    %v432 = vunpack.c.h.b16 %v277
    %v433 = vunpack.c.l.b16 %v278
    %v434 = vunpack.c.h.b16 %v278
    %v435 = vunpack.c.l.b16 %v279
    %v436 = vunpack.c.h.b16 %v279
    %v437 = vunpack.c.l.b16 %v280
    %v438 = vunpack.c.h.b16 %v280
    %v439 = vunpack.c.l.b16 %v281
    %v440 = vunpack.c.h.b16 %v281
    %v441 = vunpack.c.l.b16 %v282
    %v442 = vunpack.c.h.b16 %v282
    %v443 = vunpack.c.l.b16 %v283
    %v444 = vunpack.c.h.b16 %v283
    %v445 = vunpack.c.l.b16 %v284
    %v446 = vunpack.c.h.b16 %v284
    %v447 = vunpack.c.l.b16 %v285
    %v448 = vunpack.c.h.b16 %v285
    %v449 = vunpack.c.l.b16 %v286
    %v450 = vunpack.c.h.b16 %v286
    %v451 = vunpack.c.l.b16 %v287
    %v452 = vunpack.c.h.b16 %v287
    %v453 = vunpack.c.l.b16 %v288
    %v454 = vunpack.c.h.b16 %v288
    %v455 = vunpack.c.l.b16 %v289
    %v456 = vunpack.c.h.b16 %v289
    %v457 = vunpack.c.l.b16 %v290
    %v458 = vunpack.c.h.b16 %v290
    %v459 = vunpack.c.l.b16 %v291
    %v460 = vunpack.c.h.b16 %v291
    %v461 = vunpack.c.l.b16 %v292
    %v462 = vunpack.c.h.b16 %v292
    %v463 = vunpack.c.l.b16 %v293
    %v464 = vunpack.c.h.b16 %v293
    %v465 = vunpack.c.l.b16 %v294
    %v466 = vunpack.c.h.b16 %v294
    %v467 = vunpack.c.l.b16 %v295
    %v468 = vunpack.c.h.b16 %v295
    %v469 = vunpack.c.l.b16 %v296
    %v470 = vunpack.c.h.b16 %v296
    %v471 = vunpack.c.l.b16 %v297
    %v472 = vunpack.c.h.b16 %v297
    %v473 = vunpack.c.l.b16 %v298
    %v474 = vunpack.c.h.b16 %v298
    %v475 = vunpack.c.l.b16 %v299
    %v476 = vunpack.c.h.b16 %v299
    %v477 = vunpack.c.l.b16 %v300
    %v478 = vunpack.c.h.b16 %v300
    %v479 = vunpack.c.l.b16 %v301
    %v480 = vunpack.c.h.b16 %v301
    %v481 = vunpack.c.l.b16 %v302
    %v482 = vunpack.c.h.b16 %v302
    %v483 = vunpack.c.l.b16 %v303
    %v484 = vunpack.c.h.b16 %v303
    %v485 = vunpack.c.l.b16 %v304
    %v486 = vunpack.c.h.b16 %v304
    %v487 = vunpack.c.l.b16 %v305
    %v488 = vunpack.c.h.b16 %v305
    %v489 = vunpack.c.l.b16 %v306
    %v490 = vunpack.c.h.b16 %v306
    %v491 = vunpack.c.l.b16 %v307
    %v492 = vunpack.c.h.b16 %v307
    %v493 = vunpack.c.l.b16 %v308
    %v494 = vunpack.c.h.b16 %v308
    %v495 = vunpack.c.l.b16 %v309
    %v496 = vunpack.c.h.b16 %v309
    %v497 = vunpack.c.l.b16 %v310
    %v498 = vunpack.c.h.b16 %v310
    %v499 = vunpack.c.l.b16 %v311
    %v500 = vunpack.c.h.b16 %v311
    %v501 = vunpack.c.l.b16 %v312
    %v502 = vunpack.c.h.b16 %v312
    %v503 = vunpack.c.l.b16 %v313
    %v504 = vunpack.c.h.b16 %v313
    %v505 = vunpack.c.l.b16 %v314
    %v506 = vunpack.c.h.b16 %v314
    %v507 = vunpack.c.l.b16 %v315
    %v508 = vunpack.c.h.b16 %v315
    %v509 = vunpack.c.l.b16 %v316
    %v510 = vunpack.c.h.b16 %v316
    %v511 = vunpack.c.l.b16 %v317
    %v512 = vunpack.c.h.b16 %v317
    %v513 = vunpack.c.l.b16 %v318
    %v514 = vunpack.c.h.b16 %v318
    %v515 = vunpack.c.l.b16 %v319
    %v516 = vunpack.c.h.b16 %v319
    %v517 = vunpack.c.l.b16 %v320
    %v518 = vunpack.c.h.b16 %v320
    %v519 = vunpack.c.l.b16 %v321
    %v520 = vunpack.c.h.b16 %v321
    %v521 = vunpack.c.l.b16 %v322
    %v522 = vunpack.c.h.b16 %v322
    %v523 = vunpack.c.l.b16 %v323
    %v524 = vunpack.c.h.b16 %v323
    %v525 = vunpack.c.l.b16 %v324
    %v526 = vunpack.c.h.b16 %v324
    %v527 = vpack.c.b16 %v403, %v399
    %v528 = vpack.c.b16 %v404, %v400
    %v529 = vpack.c.b16 %v405, %v401
    %v530 = vpack.c.b16 %v406, %v402
    %v531 = vpack.c.b16 %v411, %v407
    %v532 = vpack.c.b16 %v412, %v408
    %v533 = vpack.c.b16 %v413, %v409
    %v534 = vpack.c.b16 %v414, %v410
    %v535 = vpack.c.b16 %v419, %v415
    %v536 = vpack.c.b16 %v420, %v416
    %v537 = vpack.c.b16 %v421, %v417
    %v538 = vpack.c.b16 %v422, %v418
    %v539 = vpack.c.b16 %v427, %v423
    %v540 = vpack.c.b16 %v428, %v424
    %v541 = vpack.c.b16 %v429, %v425
    %v542 = vpack.c.b16 %v430, %v426
    %v543 = vpack.c.b16 %v435, %v431
    %v544 = vpack.c.b16 %v436, %v432
    %v545 = vpack.c.b16 %v437, %v433
    %v546 = vpack.c.b16 %v438, %v434
    %v547 = vpack.c.b16 %v443, %v439
    %v548 = vpack.c.b16 %v444, %v440
    %v549 = vpack.c.b16 %v445, %v441
    %v550 = vpack.c.b16 %v446, %v442
    %v551 = vpack.c.b16 %v451, %v447
    %v552 = vpack.c.b16 %v452, %v448
    %v553 = vpack.c.b16 %v453, %v449
    %v554 = vpack.c.b16 %v454, %v450
    %v555 = vpack.c.b16 %v459, %v455
    %v556 = vpack.c.b16 %v460, %v456
    %v557 = vpack.c.b16 %v461, %v457
    %v558 = vpack.c.b16 %v462, %v458
    %v559 = vpack.c.b16 %v467, %v463
    %v560 = vpack.c.b16 %v468, %v464
    %v561 = vpack.c.b16 %v469, %v465
    %v562 = vpack.c.b16 %v470, %v466
    %v563 = vpack.c.b16 %v475, %v471
    %v564 = vpack.c.b16 %v476, %v472
    %v565 = vpack.c.b16 %v477, %v473
    %v566 = vpack.c.b16 %v478, %v474
    %v567 = vpack.c.b16 %v483, %v479
    %v568 = vpack.c.b16 %v484, %v480
    %v569 = vpack.c.b16 %v485, %v481
    %v570 = vpack.c.b16 %v486, %v482
    %v571 = vpack.c.b16 %v491, %v487
    %v572 = vpack.c.b16 %v492, %v488
    %v573 = vpack.c.b16 %v493, %v489
    %v574 = vpack.c.b16 %v494, %v490
    %v575 = vpack.c.b16 %v499, %v495
    %v576 = vpack.c.b16 %v500, %v496
    %v577 = vpack.c.b16 %v501, %v497
    %v578 = vpack.c.b16 %v502, %v498
    %v579 = vpack.c.b16 %v507, %v503
    %v580 = vpack.c.b16 %v508, %v504
    %v581 = vpack.c.b16 %v509, %v505
    %v582 = vpack.c.b16 %v510, %v506
    %v583 = vpack.c.b16 %v515, %v511
    %v584 = vpack.c.b16 %v516, %v512
    %v585 = vpack.c.b16 %v517, %v513
    %v586 = vpack.c.b16 %v518, %v514
    %v587 = vpack.c.b16 %v523, %v519
    %v588 = vpack.c.b16 %v524, %v520
    %v589 = vpack.c.b16 %v525, %v521
    %v590 = vpack.c.b16 %v526, %v522
    %655 = vmatpush.bf16.msra.mxu0 %v555
    %656 = vmatpush.bf16.msra.mxu0 %v551
    %657 = vmatpush.bf16.msra.mxu0 %v547
    %658 = vmatpush.bf16.msra.mxu0 %v543
    %659 = vmatpush.bf16.msra.mxu0 %v539
    %660 = vmatpush.bf16.msra.mxu0 %v535
    %661 = vmatpush.bf16.msra.mxu0 %v531
    %662 = vmatpush.bf16.msra.mxu0 %v527
    %663 = vmatmul.bf16.gmra.mxu0 %v259
    %v664 = vpop.f32.mrf.mxu0
    %v665 = vadd.f32 %v327, %v664
    %v666 = vpop.f32.mrf.mxu0
    %667 = vdwg.mxu0
    %668 = vmatpush.bf16.msra.mxu0 %v587
    %669 = vmatpush.bf16.msra.mxu0 %v583
    %670 = vmatpush.bf16.msra.mxu0 %v579
    %671 = vmatpush.bf16.msra.mxu0 %v575
    %672 = vmatpush.bf16.msra.mxu0 %v571
    %673 = vmatpush.bf16.msra.mxu0 %v567
    %674 = vmatpush.bf16.msra.mxu0 %v563
    %675 = vmatpush.bf16.msra.mxu0 %v559
    %676 = vmatmul.bf16.gmra.mxu0 %v260
    %v677 = vpop.f32.mrf.mxu0
    %v678 = vadd.f32 %v665, %v677
    %v679 = vpop.f32.mrf.mxu0
    %680 = vdwg.mxu0
    %681 = vmatpush.bf16.msra.mxu0 %v556
    %682 = vmatpush.bf16.msra.mxu0 %v552
    %683 = vmatpush.bf16.msra.mxu0 %v548
    %684 = vmatpush.bf16.msra.mxu0 %v544
    %685 = vmatpush.bf16.msra.mxu0 %v540
    %686 = vmatpush.bf16.msra.mxu0 %v536
    %687 = vmatpush.bf16.msra.mxu0 %v532
    %688 = vmatpush.bf16.msra.mxu0 %v528
    %689 = vmatmul.bf16.gmra.mxu0 %v259
    %v690 = vpop.f32.mrf.mxu0
    %v691 = vadd.f32 %v328, %v690
    %v692 = vpop.f32.mrf.mxu0
    %693 = vdwg.mxu0
    %694 = vmatpush.bf16.msra.mxu0 %v588
    %695 = vmatpush.bf16.msra.mxu0 %v584
    %696 = vmatpush.bf16.msra.mxu0 %v580
    %697 = vmatpush.bf16.msra.mxu0 %v576
    %698 = vmatpush.bf16.msra.mxu0 %v572
    %699 = vmatpush.bf16.msra.mxu0 %v568
    %700 = vmatpush.bf16.msra.mxu0 %v564
    %701 = vmatpush.bf16.msra.mxu0 %v560
    %702 = vmatmul.bf16.gmra.mxu0 %v260
    %v703 = vpop.f32.mrf.mxu0
    %v704 = vadd.f32 %v691, %v703
    %v705 = vpop.f32.mrf.mxu0
    %706 = vdwg.mxu0
    %707 = vmatpush.bf16.msra.mxu0 %v557
    %708 = vmatpush.bf16.msra.mxu0 %v553
    %709 = vmatpush.bf16.msra.mxu0 %v549
    %710 = vmatpush.bf16.msra.mxu0 %v545
    %711 = vmatpush.bf16.msra.mxu0 %v541
    %712 = vmatpush.bf16.msra.mxu0 %v537
    %713 = vmatpush.bf16.msra.mxu0 %v533
    %714 = vmatpush.bf16.msra.mxu0 %v529
    %715 = vmatmul.bf16.gmra.mxu0 %v259
    %v716 = vpop.f32.mrf.mxu0
    %v717 = vadd.f32 %v329, %v716
    %v718 = vpop.f32.mrf.mxu0
    %719 = vdwg.mxu0
    %720 = vmatpush.bf16.msra.mxu0 %v589
    %721 = vmatpush.bf16.msra.mxu0 %v585
    %722 = vmatpush.bf16.msra.mxu0 %v581
    %723 = vmatpush.bf16.msra.mxu0 %v577
    %724 = vmatpush.bf16.msra.mxu0 %v573
    %725 = vmatpush.bf16.msra.mxu0 %v569
    %726 = vmatpush.bf16.msra.mxu0 %v565
    %727 = vmatpush.bf16.msra.mxu0 %v561
    %728 = vmatmul.bf16.gmra.mxu0 %v260
    %v729 = vpop.f32.mrf.mxu0
    %v730 = vadd.f32 %v717, %v729
    %v731 = vpop.f32.mrf.mxu0
    %732 = vdwg.mxu0
    %733 = vmatpush.bf16.msra.mxu0 %v558
    %734 = vmatpush.bf16.msra.mxu0 %v554
    %735 = vmatpush.bf16.msra.mxu0 %v550
    %736 = vmatpush.bf16.msra.mxu0 %v546
    %737 = vmatpush.bf16.msra.mxu0 %v542
    %738 = vmatpush.bf16.msra.mxu0 %v538
    %739 = vmatpush.bf16.msra.mxu0 %v534
    %740 = vmatpush.bf16.msra.mxu0 %v530
    %741 = vmatmul.bf16.gmra.mxu0 %v259
    %v742 = vpop.f32.mrf.mxu0
    %v743 = vadd.f32 %v330, %v742
    %v744 = vpop.f32.mrf.mxu0
    %745 = vdwg.mxu0
    %746 = vmatpush.bf16.msra.mxu0 %v590
    %747 = vmatpush.bf16.msra.mxu0 %v586
    %748 = vmatpush.bf16.msra.mxu0 %v582
    %749 = vmatpush.bf16.msra.mxu0 %v578
    %750 = vmatpush.bf16.msra.mxu0 %v574
    %751 = vmatpush.bf16.msra.mxu0 %v570
    %752 = vmatpush.bf16.msra.mxu0 %v566
    %753 = vmatpush.bf16.msra.mxu0 %v562
    %754 = vmatmul.bf16.gmra.mxu0 %v260
    %v755 = vpop.f32.mrf.mxu0
    %v756 = vadd.f32 %v743, %v755
    %v757 = vpop.f32.mrf.mxu0
    %758 = vdwg.mxu0
    %v759 = vmax.f32 %v678, 0.0
    %v760 = vmax.f32 %v704, 0.0
    %v761 = vmax.f32 %v730, 0.0
    %v762 = vmax.f32 %v756, 0.0
    %v763 = vpack.c.bf16 %v759, %v759
    %v764 = vpack.c.bf16 %v760, %v760
    %v765 = vpack.c.bf16 %v761, %v761
    %v766 = vpack.c.bf16 %v762, %v762
    %v767 = vld [vmem:[#allocation11] sm:$0xff]
    %v768 = vld [vmem:[#allocation11 + $0x8] sm:$0xff]
    %v769 = vld [vmem:[#allocation11 + $0x10] sm:$0xff]
    %v770 = vld [vmem:[#allocation11 + $0x18] sm:$0xf]
    %v771 = vld [vmem:[#allocation11 + $0x1c] sm:$0xff]
    %v772 = vld [vmem:[#allocation11 + $0x24] sm:$0xff]
    %v773 = vld [vmem:[#allocation11 + $0x2c] sm:$0xff]
    %v774 = vld [vmem:[#allocation11 + $0x34] sm:$0xf]
    %v775 = vld [vmem:[#allocation11 + $0x38] sm:$0xff]
    %v776 = vld [vmem:[#allocation11 + $0x40] sm:$0xff]
    %v777 = vld [vmem:[#allocation11 + $0x48] sm:$0xff]
    %v778 = vld [vmem:[#allocation11 + $0x50] sm:$0xf]
    %v779 = vld [vmem:[#allocation11 + $0x54] sm:$0xff]
    %v780 = vld [vmem:[#allocation11 + $0x5c] sm:$0xff]
    %v781 = vld [vmem:[#allocation11 + $0x64] sm:$0xff]
    %v782 = vld [vmem:[#allocation11 + $0x6c] sm:$0xf]
    %v783 = vld [vmem:[#allocation11 + $0x70] sm:$0xff]
    %v784 = vld [vmem:[#allocation11 + $0x78] sm:$0xff]
    %v785 = vld [vmem:[#allocation11 + $0x80] sm:$0xff]
    %v786 = vld [vmem:[#allocation11 + $0x88] sm:$0xf]
    %v787 = vld [vmem:[#allocation11 + $0x8c] sm:$0xff]
    %v788 = vld [vmem:[#allocation11 + $0x94] sm:$0xff]
    %v789 = vld [vmem:[#allocation11 + $0x9c] sm:$0xff]
    %v790 = vld [vmem:[#allocation11 + $0xa4] sm:$0xf]
    %v791 = vld [vmem:[#allocation11 + $0xa8] sm:$0xff]
    %v792 = vld [vmem:[#allocation11 + $0xb0] sm:$0xff]
    %v793 = vld [vmem:[#allocation11 + $0xb8] sm:$0xff]
    %v794 = vld [vmem:[#allocation11 + $0xc0] sm:$0xf]
    %v795 = vld [vmem:[#allocation11 + $0xc4] sm:$0xff]
    %v796 = vld [vmem:[#allocation11 + $0xcc] sm:$0xff]
    %v797 = vld [vmem:[#allocation11 + $0xd4] sm:$0xff]
    %v798 = vld [vmem:[#allocation11 + $0xdc] sm:$0xf]
    %v799 = vld [vmem:[#allocation11 + $0xe0] sm:$0xff]
    %v800 = vld [vmem:[#allocation11 + $0xe8] sm:$0xff]
    %v801 = vld [vmem:[#allocation11 + $0xf0] sm:$0xff]
    %v802 = vld [vmem:[#allocation11 + $0xf8] sm:$0xf]
    %v803 = vld [vmem:[#allocation11 + $0xfc] sm:$0xff]
    %v804 = vld [vmem:[#allocation11 + $0x104] sm:$0xff]
    %v805 = vld [vmem:[#allocation11 + $0x10c] sm:$0xff]
    %v806 = vld [vmem:[#allocation11 + $0x114] sm:$0xf]
    %v807 = vld [vmem:[#allocation11 + $0x118] sm:$0xff]
    %v808 = vld [vmem:[#allocation11 + $0x120] sm:$0xff]
    %v809 = vld [vmem:[#allocation11 + $0x128] sm:$0xff]
    %v810 = vld [vmem:[#allocation11 + $0x130] sm:$0xf]
    %v811 = vld [vmem:[#allocation11 + $0x134] sm:$0xff]
    %v812 = vld [vmem:[#allocation11 + $0x13c] sm:$0xff]
    %v813 = vld [vmem:[#allocation11 + $0x144] sm:$0xff]
    %v814 = vld [vmem:[#allocation11 + $0x14c] sm:$0xf]
    %v815 = vld [vmem:[#allocation11 + $0x150] sm:$0xff]
    %v816 = vld [vmem:[#allocation11 + $0x158] sm:$0xff]
    %v817 = vld [vmem:[#allocation11 + $0x160] sm:$0xff]
    %v818 = vld [vmem:[#allocation11 + $0x168] sm:$0xf]
    %v819 = vld [vmem:[#allocation11 + $0x16c] sm:$0xff]
    %v820 = vld [vmem:[#allocation11 + $0x174] sm:$0xff]
    %v821 = vld [vmem:[#allocation11 + $0x17c] sm:$0xff]
    %v822 = vld [vmem:[#allocation11 + $0x184] sm:$0xf]
    %v823 = vld [vmem:[#allocation11 + $0x188] sm:$0xff]
    %v824 = vld [vmem:[#allocation11 + $0x190] sm:$0xff]
    %v825 = vld [vmem:[#allocation11 + $0x198] sm:$0xff]
    %v826 = vld [vmem:[#allocation11 + $0x1a0] sm:$0xf]
    %v827 = vld [vmem:[#allocation11 + $0x1a4] sm:$0xff]
    %v828 = vld [vmem:[#allocation11 + $0x1ac] sm:$0xff]
    %v829 = vld [vmem:[#allocation11 + $0x1b4] sm:$0xff]
    %v830 = vld [vmem:[#allocation11 + $0x1bc] sm:$0xf]
    %v831 = vld [vmem:[#allocation11 + $0x1c0] sm:$0xff]
    %v832 = vld [vmem:[#allocation11 + $0x1c8] sm:$0xff]
    %v833 = vld [vmem:[#allocation11 + $0x1d0] sm:$0xff]
    %v834 = vld [vmem:[#allocation11 + $0x1d8] sm:$0xf]
    %v835 = vld [vmem:[#allocation11 + $0x1dc] sm:$0xff]
    %v836 = vld [vmem:[#allocation11 + $0x1e4] sm:$0xff]
    %v837 = vld [vmem:[#allocation11 + $0x1ec] sm:$0xff]
    %v838 = vld [vmem:[#allocation11 + $0x1f4] sm:$0xf]
    %v839 = vld [vmem:[#allocation11 + $0x1f8] sm:$0xff]
    %v840 = vld [vmem:[#allocation11 + $0x200] sm:$0xff]
    %v841 = vld [vmem:[#allocation11 + $0x208] sm:$0xff]
    %v842 = vld [vmem:[#allocation11 + $0x210] sm:$0xf]
    %v843 = vld [vmem:[#allocation11 + $0x214] sm:$0xff]
    %v844 = vld [vmem:[#allocation11 + $0x21c] sm:$0xff]
    %v845 = vld [vmem:[#allocation11 + $0x224] sm:$0xff]
    %v846 = vld [vmem:[#allocation11 + $0x22c] sm:$0xf]
    %v847 = vld [vmem:[#allocation11 + $0x230] sm:$0xff]
    %v848 = vld [vmem:[#allocation11 + $0x238] sm:$0xff]
    %v849 = vld [vmem:[#allocation11 + $0x240] sm:$0xff]
    %v850 = vld [vmem:[#allocation11 + $0x248] sm:$0xf]
    %v851 = vld [vmem:[#allocation11 + $0x24c] sm:$0xff]
    %v852 = vld [vmem:[#allocation11 + $0x254] sm:$0xff]
    %v853 = vld [vmem:[#allocation11 + $0x25c] sm:$0xff]
    %v854 = vld [vmem:[#allocation11 + $0x264] sm:$0xf]
    %v855 = vld [vmem:[#allocation11 + $0x268] sm:$0xff]
    %v856 = vld [vmem:[#allocation11 + $0x270] sm:$0xff]
    %v857 = vld [vmem:[#allocation11 + $0x278] sm:$0xff]
    %v858 = vld [vmem:[#allocation11 + $0x280] sm:$0xf]
    %v859 = vld [vmem:[#allocation11 + $0x284] sm:$0xff]
    %v860 = vld [vmem:[#allocation11 + $0x28c] sm:$0xff]
    %v861 = vld [vmem:[#allocation11 + $0x294] sm:$0xff]
    %v862 = vld [vmem:[#allocation11 + $0x29c] sm:$0xf]
    %v863 = vld [vmem:[#allocation11 + $0x2a0] sm:$0xff]
    %v864 = vld [vmem:[#allocation11 + $0x2a8] sm:$0xff]
    %v865 = vld [vmem:[#allocation11 + $0x2b0] sm:$0xff]
    %v866 = vld [vmem:[#allocation11 + $0x2b8] sm:$0xf]
    %v867 = vld [vmem:[#allocation11 + $0x2bc] sm:$0xff]
    %v868 = vld [vmem:[#allocation11 + $0x2c4] sm:$0xff]
    %v869 = vld [vmem:[#allocation11 + $0x2cc] sm:$0xff]
    %v870 = vld [vmem:[#allocation11 + $0x2d4] sm:$0xf]
    %v871 = vld [vmem:[#allocation11 + $0x2d8] sm:$0xff]
    %v872 = vld [vmem:[#allocation11 + $0x2e0] sm:$0xff]
    %v873 = vld [vmem:[#allocation11 + $0x2e8] sm:$0xff]
    %v874 = vld [vmem:[#allocation11 + $0x2f0] sm:$0xf]
    %v875 = vld [vmem:[#allocation11 + $0x2f4] sm:$0xff]
    %v876 = vld [vmem:[#allocation11 + $0x2fc] sm:$0xff]
    %v877 = vld [vmem:[#allocation11 + $0x304] sm:$0xff]
    %v878 = vld [vmem:[#allocation11 + $0x30c] sm:$0xf]
    %v879 = vld [vmem:[#allocation11 + $0x310] sm:$0xff]
    %v880 = vld [vmem:[#allocation11 + $0x318] sm:$0xff]
    %v881 = vld [vmem:[#allocation11 + $0x320] sm:$0xff]
    %v882 = vld [vmem:[#allocation11 + $0x328] sm:$0xf]
    %v883 = vld [vmem:[#allocation11 + $0x32c] sm:$0xff]
    %v884 = vld [vmem:[#allocation11 + $0x334] sm:$0xff]
    %v885 = vld [vmem:[#allocation11 + $0x33c] sm:$0xff]
    %v886 = vld [vmem:[#allocation11 + $0x344] sm:$0xf]
    %v887 = vld [vmem:[#allocation11 + $0x348] sm:$0xff]
    %v888 = vld [vmem:[#allocation11 + $0x350] sm:$0xff]
    %v889 = vld [vmem:[#allocation11 + $0x358] sm:$0xff]
    %v890 = vld [vmem:[#allocation11 + $0x360] sm:$0xf]
    %v891 = vld [vmem:[#allocation11 + $0x364] sm:$0xff]
    %v892 = vld [vmem:[#allocation11 + $0x36c] sm:$0xff]
    %v893 = vld [vmem:[#allocation11 + $0x374] sm:$0xff]
    %v894 = vld [vmem:[#allocation11 + $0x37c] sm:$0xf]
    %v895 = vld [vmem:[#allocation11 + $0x380] sm:$0xff]
    %v896 = vld [vmem:[#allocation11 + $0x388] sm:$0xff]
    %v897 = vld [vmem:[#allocation11 + $0x390] sm:$0xff]
    %v898 = vld [vmem:[#allocation11 + $0x398] sm:$0xf]
    %v899 = vld [vmem:[#allocation11 + $0x39c] sm:$0xff]
    %v900 = vld [vmem:[#allocation11 + $0x3a4] sm:$0xff]
    %v901 = vld [vmem:[#allocation11 + $0x3ac] sm:$0xff]
    %v902 = vld [vmem:[#allocation11 + $0x3b4] sm:$0xf]
    %v903 = vld [vmem:[#allocation11 + $0x3b8] sm:$0xff]
    %v904 = vld [vmem:[#allocation11 + $0x3c0] sm:$0xff]
    %v905 = vld [vmem:[#allocation11 + $0x3c8] sm:$0xff]
    %v906 = vld [vmem:[#allocation11 + $0x3d0] sm:$0xf]
    %v907 = vld [vmem:[#allocation11 + $0x3d4] sm:$0xff]
    %v908 = vld [vmem:[#allocation11 + $0x3dc] sm:$0xff]
    %v909 = vld [vmem:[#allocation11 + $0x3e4] sm:$0xff]
    %v910 = vld [vmem:[#allocation11 + $0x3ec] sm:$0xf]
    %v911 = vld [vmem:[#allocation11 + $0x3f0] sm:$0xff]
    %v912 = vld [vmem:[#allocation11 + $0x3f8] sm:$0xff]
    %v913 = vld [vmem:[#allocation11 + $0x400] sm:$0xff]
    %v914 = vld [vmem:[#allocation11 + $0x408] sm:$0xf]
    %v915 = vld [vmem:[#allocation11 + $0x40c] sm:$0xff]
    %v916 = vld [vmem:[#allocation11 + $0x414] sm:$0xff]
    %v917 = vld [vmem:[#allocation11 + $0x41c] sm:$0xff]
    %v918 = vld [vmem:[#allocation11 + $0x424] sm:$0xf]
    %v919 = vld [vmem:[#allocation11 + $0x428] sm:$0xff]
    %v920 = vld [vmem:[#allocation11 + $0x430] sm:$0xff]
    %v921 = vld [vmem:[#allocation11 + $0x438] sm:$0xff]
    %v922 = vld [vmem:[#allocation11 + $0x440] sm:$0xf]
    %v923 = vld [vmem:[#allocation11 + $0x444] sm:$0xff]
    %v924 = vld [vmem:[#allocation11 + $0x44c] sm:$0xff]
    %v925 = vld [vmem:[#allocation11 + $0x454] sm:$0xff]
    %v926 = vld [vmem:[#allocation11 + $0x45c] sm:$0xf]
    %v927 = vld [vmem:[#allocation11 + $0x460] sm:$0xff]
    %v928 = vld [vmem:[#allocation11 + $0x468] sm:$0xff]
    %v929 = vld [vmem:[#allocation11 + $0x470] sm:$0xff]
    %v930 = vld [vmem:[#allocation11 + $0x478] sm:$0xf]
    %v931 = vld [vmem:[#allocation11 + $0x47c] sm:$0xff]
    %v932 = vld [vmem:[#allocation11 + $0x484] sm:$0xff]
    %v933 = vld [vmem:[#allocation11 + $0x48c] sm:$0xff]
    %v934 = vld [vmem:[#allocation11 + $0x494] sm:$0xf]
    %v935 = vld [vmem:[#allocation11 + $0x498] sm:$0xff]
    %v936 = vld [vmem:[#allocation11 + $0x4a0] sm:$0xff]
    %v937 = vld [vmem:[#allocation11 + $0x4a8] sm:$0xff]
    %v938 = vld [vmem:[#allocation11 + $0x4b0] sm:$0xf]
    %v939 = vld [vmem:[#allocation11 + $0x4b4] sm:$0xff]
    %v940 = vld [vmem:[#allocation11 + $0x4bc] sm:$0xff]
    %v941 = vld [vmem:[#allocation11 + $0x4c4] sm:$0xff]
    %v942 = vld [vmem:[#allocation11 + $0x4cc] sm:$0xf]
    %v943 = vld [vmem:[#allocation11 + $0x4d0] sm:$0xff]
    %v944 = vld [vmem:[#allocation11 + $0x4d8] sm:$0xff]
    %v945 = vld [vmem:[#allocation11 + $0x4e0] sm:$0xff]
    %v946 = vld [vmem:[#allocation11 + $0x4e8] sm:$0xf]
    %v947 = vld [vmem:[#allocation11 + $0x4ec] sm:$0xff]
    %v948 = vld [vmem:[#allocation11 + $0x4f4] sm:$0xff]
    %v949 = vld [vmem:[#allocation11 + $0x4fc] sm:$0xff]
    %v950 = vld [vmem:[#allocation11 + $0x504] sm:$0xf]
    %v951 = vld [vmem:[#allocation11 + $0x508] sm:$0xff]
    %v952 = vld [vmem:[#allocation11 + $0x510] sm:$0xff]
    %v953 = vld [vmem:[#allocation11 + $0x518] sm:$0xff]
    %v954 = vld [vmem:[#allocation11 + $0x520] sm:$0xf]
    %v955 = vld [vmem:[#allocation11 + $0x524] sm:$0xff]
    %v956 = vld [vmem:[#allocation11 + $0x52c] sm:$0xff]
    %v957 = vld [vmem:[#allocation11 + $0x534] sm:$0xff]
    %v958 = vld [vmem:[#allocation11 + $0x53c] sm:$0xf]
    %v959 = vld [vmem:[#allocation11 + $0x540] sm:$0xff]
    %v960 = vld [vmem:[#allocation11 + $0x548] sm:$0xff]
    %v961 = vld [vmem:[#allocation11 + $0x550] sm:$0xff]
    %v962 = vld [vmem:[#allocation11 + $0x558] sm:$0xf]
    %v963 = vld [vmem:[#allocation11 + $0x55c] sm:$0xff]
    %v964 = vld [vmem:[#allocation11 + $0x564] sm:$0xff]
    %v965 = vld [vmem:[#allocation11 + $0x56c] sm:$0xff]
    %v966 = vld [vmem:[#allocation11 + $0x574] sm:$0xf]
    %v967 = vld [vmem:[#allocation11 + $0x578] sm:$0xff]
    %v968 = vld [vmem:[#allocation11 + $0x580] sm:$0xff]
    %v969 = vld [vmem:[#allocation11 + $0x588] sm:$0xff]
    %v970 = vld [vmem:[#allocation11 + $0x590] sm:$0xf]
    %v971 = vld [vmem:[#allocation11 + $0x594] sm:$0xff]
    %v972 = vld [vmem:[#allocation11 + $0x59c] sm:$0xff]
    %v973 = vld [vmem:[#allocation11 + $0x5a4] sm:$0xff]
    %v974 = vld [vmem:[#allocation11 + $0x5ac] sm:$0xf]
    %v975 = vld [vmem:[#allocation11 + $0x5b0] sm:$0xff]
    %v976 = vld [vmem:[#allocation11 + $0x5b8] sm:$0xff]
    %v977 = vld [vmem:[#allocation11 + $0x5c0] sm:$0xff]
    %v978 = vld [vmem:[#allocation11 + $0x5c8] sm:$0xf]
    %v979 = vld [vmem:[#allocation11 + $0x5cc] sm:$0xff]
    %v980 = vld [vmem:[#allocation11 + $0x5d4] sm:$0xff]
    %v981 = vld [vmem:[#allocation11 + $0x5dc] sm:$0xff]
    %v982 = vld [vmem:[#allocation11 + $0x5e4] sm:$0xf]
    %v983 = vld [vmem:[#allocation11 + $0x5e8] sm:$0xff]
    %v984 = vld [vmem:[#allocation11 + $0x5f0] sm:$0xff]
    %v985 = vld [vmem:[#allocation11 + $0x5f8] sm:$0xff]
    %v986 = vld [vmem:[#allocation11 + $0x600] sm:$0xf]
    %v987 = vld [vmem:[#allocation11 + $0x604] sm:$0xff]
    %v988 = vld [vmem:[#allocation11 + $0x60c] sm:$0xff]
    %v989 = vld [vmem:[#allocation11 + $0x614] sm:$0xff]
    %v990 = vld [vmem:[#allocation11 + $0x61c] sm:$0xf]
    %v991 = vld [vmem:[#allocation11 + $0x620] sm:$0xff]
    %v992 = vld [vmem:[#allocation11 + $0x628] sm:$0xff]
    %v993 = vld [vmem:[#allocation11 + $0x630] sm:$0xff]
    %v994 = vld [vmem:[#allocation11 + $0x638] sm:$0xf]
    %v995 = vld [vmem:[#allocation11 + $0x63c] sm:$0xff]
    %v996 = vld [vmem:[#allocation11 + $0x644] sm:$0xff]
    %v997 = vld [vmem:[#allocation11 + $0x64c] sm:$0xff]
    %v998 = vld [vmem:[#allocation11 + $0x654] sm:$0xf]
    %v999 = vld [vmem:[#allocation11 + $0x658] sm:$0xff]
    %v1000 = vld [vmem:[#allocation11 + $0x660] sm:$0xff]
    %v1001 = vld [vmem:[#allocation11 + $0x668] sm:$0xff]
    %v1002 = vld [vmem:[#allocation11 + $0x670] sm:$0xf]
    %v1003 = vld [vmem:[#allocation11 + $0x674] sm:$0xff]
    %v1004 = vld [vmem:[#allocation11 + $0x67c] sm:$0xff]
    %v1005 = vld [vmem:[#allocation11 + $0x684] sm:$0xff]
    %v1006 = vld [vmem:[#allocation11 + $0x68c] sm:$0xf]
    %v1007 = vld [vmem:[#allocation11 + $0x690] sm:$0xff]
    %v1008 = vld [vmem:[#allocation11 + $0x698] sm:$0xff]
    %v1009 = vld [vmem:[#allocation11 + $0x6a0] sm:$0xff]
    %v1010 = vld [vmem:[#allocation11 + $0x6a8] sm:$0xf]
    %v1011 = vld [vmem:[#allocation11 + $0x6ac] sm:$0xff]
    %v1012 = vld [vmem:[#allocation11 + $0x6b4] sm:$0xff]
    %v1013 = vld [vmem:[#allocation11 + $0x6bc] sm:$0xff]
    %v1014 = vld [vmem:[#allocation11 + $0x6c4] sm:$0xf]
    %v1015 = vld [vmem:[#allocation11 + $0x6c8] sm:$0xff]
    %v1016 = vld [vmem:[#allocation11 + $0x6d0] sm:$0xff]
    %v1017 = vld [vmem:[#allocation11 + $0x6d8] sm:$0xff]
    %v1018 = vld [vmem:[#allocation11 + $0x6e0] sm:$0xf]
    %v1019 = vld [vmem:[#allocation11 + $0x6e4] sm:$0xff]
    %v1020 = vld [vmem:[#allocation11 + $0x6ec] sm:$0xff]
    %v1021 = vld [vmem:[#allocation11 + $0x6f4] sm:$0xff]
    %v1022 = vld [vmem:[#allocation11 + $0x6fc] sm:$0xf]
    %v1023 = vld [vmem:[#allocation13] sm:$0xff]
    %v1025 = vperm.slane %v1023, 0
    %v1026 = vperm.slane %v1023, 1
    %v1027 = vperm.slane %v1023, 2
    %v1028 = vperm.slane %v1023, 3
    %v1029 = vperm.slane %v1023, 4
    %v1030 = vperm.slane %v1023, 5
    %v1031 = vperm.slane %v1023, 6
    %v1295 = vunpack.c.l.b16 %v767
    %v1296 = vunpack.c.h.b16 %v767
    %v1297 = vunpack.c.l.b16 %v768
    %v1298 = vunpack.c.h.b16 %v768
    %v1299 = vunpack.c.l.b16 %v769
    %v1300 = vunpack.c.h.b16 %v769
    %v1301 = vunpack.c.l.b16 %v770
    %v1302 = vunpack.c.l.b16 %v771
    %v1303 = vunpack.c.h.b16 %v771
    %v1304 = vunpack.c.l.b16 %v772
    %v1305 = vunpack.c.h.b16 %v772
    %v1306 = vunpack.c.l.b16 %v773
    %v1307 = vunpack.c.h.b16 %v773
    %v1308 = vunpack.c.l.b16 %v774
    %v1309 = vunpack.c.l.b16 %v775
    %v1310 = vunpack.c.h.b16 %v775
    %v1311 = vunpack.c.l.b16 %v776
    %v1312 = vunpack.c.h.b16 %v776
    %v1313 = vunpack.c.l.b16 %v777
    %v1314 = vunpack.c.h.b16 %v777
    %v1315 = vunpack.c.l.b16 %v778
    %v1316 = vunpack.c.l.b16 %v779
    %v1317 = vunpack.c.h.b16 %v779
    %v1318 = vunpack.c.l.b16 %v780
    %v1319 = vunpack.c.h.b16 %v780
    %v1320 = vunpack.c.l.b16 %v781
    %v1321 = vunpack.c.h.b16 %v781
    %v1322 = vunpack.c.l.b16 %v782
    %v1323 = vunpack.c.l.b16 %v783
    %v1324 = vunpack.c.h.b16 %v783
    %v1325 = vunpack.c.l.b16 %v784
    %v1326 = vunpack.c.h.b16 %v784
    %v1327 = vunpack.c.l.b16 %v785
    %v1328 = vunpack.c.h.b16 %v785
    %v1329 = vunpack.c.l.b16 %v786
    %v1330 = vunpack.c.l.b16 %v787
    %v1331 = vunpack.c.h.b16 %v787
    %v1332 = vunpack.c.l.b16 %v788
    %v1333 = vunpack.c.h.b16 %v788
    %v1334 = vunpack.c.l.b16 %v789
    %v1335 = vunpack.c.h.b16 %v789
    %v1336 = vunpack.c.l.b16 %v790
    %v1337 = vunpack.c.l.b16 %v791
    %v1338 = vunpack.c.h.b16 %v791
    %v1339 = vunpack.c.l.b16 %v792
    %v1340 = vunpack.c.h.b16 %v792
    %v1341 = vunpack.c.l.b16 %v793
    %v1342 = vunpack.c.h.b16 %v793
    %v1343 = vunpack.c.l.b16 %v794
    %v1344 = vunpack.c.l.b16 %v795
    %v1345 = vunpack.c.h.b16 %v795
    %v1346 = vunpack.c.l.b16 %v796
    %v1347 = vunpack.c.h.b16 %v796
    %v1348 = vunpack.c.l.b16 %v797
    %v1349 = vunpack.c.h.b16 %v797
    %v1350 = vunpack.c.l.b16 %v798
    %v1351 = vunpack.c.l.b16 %v799
    %v1352 = vunpack.c.h.b16 %v799
    %v1353 = vunpack.c.l.b16 %v800
    %v1354 = vunpack.c.h.b16 %v800
    %v1355 = vunpack.c.l.b16 %v801
    %v1356 = vunpack.c.h.b16 %v801
    %v1357 = vunpack.c.l.b16 %v802
    %v1358 = vunpack.c.l.b16 %v803
    %v1359 = vunpack.c.h.b16 %v803
    %v1360 = vunpack.c.l.b16 %v804
    %v1361 = vunpack.c.h.b16 %v804
    %v1362 = vunpack.c.l.b16 %v805
    %v1363 = vunpack.c.h.b16 %v805
    %v1364 = vunpack.c.l.b16 %v806
    %v1365 = vunpack.c.l.b16 %v807
    %v1366 = vunpack.c.h.b16 %v807
    %v1367 = vunpack.c.l.b16 %v808
    %v1368 = vunpack.c.h.b16 %v808
    %v1369 = vunpack.c.l.b16 %v809
    %v1370 = vunpack.c.h.b16 %v809
    %v1371 = vunpack.c.l.b16 %v810
    %v1372 = vunpack.c.l.b16 %v811
    %v1373 = vunpack.c.h.b16 %v811
    %v1374 = vunpack.c.l.b16 %v812
    %v1375 = vunpack.c.h.b16 %v812
    %v1376 = vunpack.c.l.b16 %v813
    %v1377 = vunpack.c.h.b16 %v813
    %v1378 = vunpack.c.l.b16 %v814
    %v1379 = vunpack.c.l.b16 %v815
    %v1380 = vunpack.c.h.b16 %v815
    %v1381 = vunpack.c.l.b16 %v816
    %v1382 = vunpack.c.h.b16 %v816
    %v1383 = vunpack.c.l.b16 %v817
    %v1384 = vunpack.c.h.b16 %v817
    %v1385 = vunpack.c.l.b16 %v818
    %v1386 = vunpack.c.l.b16 %v819
    %v1387 = vunpack.c.h.b16 %v819
    %v1388 = vunpack.c.l.b16 %v820
    %v1389 = vunpack.c.h.b16 %v820
    %v1390 = vunpack.c.l.b16 %v821
    %v1391 = vunpack.c.h.b16 %v821
    %v1392 = vunpack.c.l.b16 %v822
    %v1393 = vunpack.c.l.b16 %v823
    %v1394 = vunpack.c.h.b16 %v823
    %v1395 = vunpack.c.l.b16 %v824
    %v1396 = vunpack.c.h.b16 %v824
    %v1397 = vunpack.c.l.b16 %v825
    %v1398 = vunpack.c.h.b16 %v825
    %v1399 = vunpack.c.l.b16 %v826
    %v1400 = vunpack.c.l.b16 %v827
    %v1401 = vunpack.c.h.b16 %v827
    %v1402 = vunpack.c.l.b16 %v828
    %v1403 = vunpack.c.h.b16 %v828
    %v1404 = vunpack.c.l.b16 %v829
    %v1405 = vunpack.c.h.b16 %v829
    %v1406 = vunpack.c.l.b16 %v830
    %v1407 = vunpack.c.l.b16 %v831
    %v1408 = vunpack.c.h.b16 %v831
    %v1409 = vunpack.c.l.b16 %v832
    %v1410 = vunpack.c.h.b16 %v832
    %v1411 = vunpack.c.l.b16 %v833
    %v1412 = vunpack.c.h.b16 %v833
    %v1413 = vunpack.c.l.b16 %v834
    %v1414 = vunpack.c.l.b16 %v835
    %v1415 = vunpack.c.h.b16 %v835
    %v1416 = vunpack.c.l.b16 %v836
    %v1417 = vunpack.c.h.b16 %v836
    %v1418 = vunpack.c.l.b16 %v837
    %v1419 = vunpack.c.h.b16 %v837
    %v1420 = vunpack.c.l.b16 %v838
    %v1421 = vunpack.c.l.b16 %v839
    %v1422 = vunpack.c.h.b16 %v839
    %v1423 = vunpack.c.l.b16 %v840
    %v1424 = vunpack.c.h.b16 %v840
    %v1425 = vunpack.c.l.b16 %v841
    %v1426 = vunpack.c.h.b16 %v841
    %v1427 = vunpack.c.l.b16 %v842
    %v1428 = vunpack.c.l.b16 %v843
    %v1429 = vunpack.c.h.b16 %v843
    %v1430 = vunpack.c.l.b16 %v844
    %v1431 = vunpack.c.h.b16 %v844
    %v1432 = vunpack.c.l.b16 %v845
    %v1433 = vunpack.c.h.b16 %v845
    %v1434 = vunpack.c.l.b16 %v846
    %v1435 = vunpack.c.l.b16 %v847
    %v1436 = vunpack.c.h.b16 %v847
    %v1437 = vunpack.c.l.b16 %v848
    %v1438 = vunpack.c.h.b16 %v848
    %v1439 = vunpack.c.l.b16 %v849
    %v1440 = vunpack.c.h.b16 %v849
    %v1441 = vunpack.c.l.b16 %v850
    %v1442 = vunpack.c.l.b16 %v851
    %v1443 = vunpack.c.h.b16 %v851
    %v1444 = vunpack.c.l.b16 %v852
    %v1445 = vunpack.c.h.b16 %v852
    %v1446 = vunpack.c.l.b16 %v853
    %v1447 = vunpack.c.h.b16 %v853
    %v1448 = vunpack.c.l.b16 %v854
    %v1449 = vunpack.c.l.b16 %v855
    %v1450 = vunpack.c.h.b16 %v855
    %v1451 = vunpack.c.l.b16 %v856
    %v1452 = vunpack.c.h.b16 %v856
    %v1453 = vunpack.c.l.b16 %v857
    %v1454 = vunpack.c.h.b16 %v857
    %v1455 = vunpack.c.l.b16 %v858
    %v1456 = vunpack.c.l.b16 %v859
    %v1457 = vunpack.c.h.b16 %v859
    %v1458 = vunpack.c.l.b16 %v860
    %v1459 = vunpack.c.h.b16 %v860
    %v1460 = vunpack.c.l.b16 %v861
    %v1461 = vunpack.c.h.b16 %v861
    %v1462 = vunpack.c.l.b16 %v862
    %v1463 = vunpack.c.l.b16 %v863
    %v1464 = vunpack.c.h.b16 %v863
    %v1465 = vunpack.c.l.b16 %v864
    %v1466 = vunpack.c.h.b16 %v864
    %v1467 = vunpack.c.l.b16 %v865
    %v1468 = vunpack.c.h.b16 %v865
    %v1469 = vunpack.c.l.b16 %v866
    %v1470 = vunpack.c.l.b16 %v867
    %v1471 = vunpack.c.h.b16 %v867
    %v1472 = vunpack.c.l.b16 %v868
    %v1473 = vunpack.c.h.b16 %v868
    %v1474 = vunpack.c.l.b16 %v869
    %v1475 = vunpack.c.h.b16 %v869
    %v1476 = vunpack.c.l.b16 %v870
    %v1477 = vunpack.c.l.b16 %v871
    %v1478 = vunpack.c.h.b16 %v871
    %v1479 = vunpack.c.l.b16 %v872
    %v1480 = vunpack.c.h.b16 %v872
    %v1481 = vunpack.c.l.b16 %v873
    %v1482 = vunpack.c.h.b16 %v873
    %v1483 = vunpack.c.l.b16 %v874
    %v1484 = vunpack.c.l.b16 %v875
    %v1485 = vunpack.c.h.b16 %v875
    %v1486 = vunpack.c.l.b16 %v876
    %v1487 = vunpack.c.h.b16 %v876
    %v1488 = vunpack.c.l.b16 %v877
    %v1489 = vunpack.c.h.b16 %v877
    %v1490 = vunpack.c.l.b16 %v878
    %v1491 = vunpack.c.l.b16 %v879
    %v1492 = vunpack.c.h.b16 %v879
    %v1493 = vunpack.c.l.b16 %v880
    %v1494 = vunpack.c.h.b16 %v880
    %v1495 = vunpack.c.l.b16 %v881
    %v1496 = vunpack.c.h.b16 %v881
    %v1497 = vunpack.c.l.b16 %v882
    %v1498 = vunpack.c.l.b16 %v883
    %v1499 = vunpack.c.h.b16 %v883
    %v1500 = vunpack.c.l.b16 %v884
    %v1501 = vunpack.c.h.b16 %v884
    %v1502 = vunpack.c.l.b16 %v885
    %v1503 = vunpack.c.h.b16 %v885
    %v1504 = vunpack.c.l.b16 %v886
    %v1505 = vunpack.c.l.b16 %v887
    %v1506 = vunpack.c.h.b16 %v887
    %v1507 = vunpack.c.l.b16 %v888
    %v1508 = vunpack.c.h.b16 %v888
    %v1509 = vunpack.c.l.b16 %v889
    %v1510 = vunpack.c.h.b16 %v889
    %v1511 = vunpack.c.l.b16 %v890
    %v1512 = vunpack.c.l.b16 %v891
    %v1513 = vunpack.c.h.b16 %v891
    %v1514 = vunpack.c.l.b16 %v892
    %v1515 = vunpack.c.h.b16 %v892
    %v1516 = vunpack.c.l.b16 %v893
    %v1517 = vunpack.c.h.b16 %v893
    %v1518 = vunpack.c.l.b16 %v894
    %v1519 = vunpack.c.l.b16 %v895
    %v1520 = vunpack.c.h.b16 %v895
    %v1521 = vunpack.c.l.b16 %v896
    %v1522 = vunpack.c.h.b16 %v896
    %v1523 = vunpack.c.l.b16 %v897
    %v1524 = vunpack.c.h.b16 %v897
    %v1525 = vunpack.c.l.b16 %v898
    %v1526 = vunpack.c.l.b16 %v899
    %v1527 = vunpack.c.h.b16 %v899
    %v1528 = vunpack.c.l.b16 %v900
    %v1529 = vunpack.c.h.b16 %v900
    %v1530 = vunpack.c.l.b16 %v901
    %v1531 = vunpack.c.h.b16 %v901
    %v1532 = vunpack.c.l.b16 %v902
    %v1533 = vunpack.c.l.b16 %v903
    %v1534 = vunpack.c.h.b16 %v903
    %v1535 = vunpack.c.l.b16 %v904
    %v1536 = vunpack.c.h.b16 %v904
    %v1537 = vunpack.c.l.b16 %v905
    %v1538 = vunpack.c.h.b16 %v905
    %v1539 = vunpack.c.l.b16 %v906
    %v1540 = vunpack.c.l.b16 %v907
    %v1541 = vunpack.c.h.b16 %v907
    %v1542 = vunpack.c.l.b16 %v908
    %v1543 = vunpack.c.h.b16 %v908
    %v1544 = vunpack.c.l.b16 %v909
    %v1545 = vunpack.c.h.b16 %v909
    %v1546 = vunpack.c.l.b16 %v910
    %v1547 = vunpack.c.l.b16 %v911
    %v1548 = vunpack.c.h.b16 %v911
    %v1549 = vunpack.c.l.b16 %v912
    %v1550 = vunpack.c.h.b16 %v912
    %v1551 = vunpack.c.l.b16 %v913
    %v1552 = vunpack.c.h.b16 %v913
    %v1553 = vunpack.c.l.b16 %v914
    %v1554 = vunpack.c.l.b16 %v915
    %v1555 = vunpack.c.h.b16 %v915
    %v1556 = vunpack.c.l.b16 %v916
    %v1557 = vunpack.c.h.b16 %v916
    %v1558 = vunpack.c.l.b16 %v917
    %v1559 = vunpack.c.h.b16 %v917
    %v1560 = vunpack.c.l.b16 %v918
    %v1561 = vunpack.c.l.b16 %v919
    %v1562 = vunpack.c.h.b16 %v919
    %v1563 = vunpack.c.l.b16 %v920
    %v1564 = vunpack.c.h.b16 %v920
    %v1565 = vunpack.c.l.b16 %v921
    %v1566 = vunpack.c.h.b16 %v921
    %v1567 = vunpack.c.l.b16 %v922
    %v1568 = vunpack.c.l.b16 %v923
    %v1569 = vunpack.c.h.b16 %v923
    %v1570 = vunpack.c.l.b16 %v924
    %v1571 = vunpack.c.h.b16 %v924
    %v1572 = vunpack.c.l.b16 %v925
    %v1573 = vunpack.c.h.b16 %v925
    %v1574 = vunpack.c.l.b16 %v926
    %v1575 = vunpack.c.l.b16 %v927
    %v1576 = vunpack.c.h.b16 %v927
    %v1577 = vunpack.c.l.b16 %v928
    %v1578 = vunpack.c.h.b16 %v928
    %v1579 = vunpack.c.l.b16 %v929
    %v1580 = vunpack.c.h.b16 %v929
    %v1581 = vunpack.c.l.b16 %v930
    %v1582 = vunpack.c.l.b16 %v931
    %v1583 = vunpack.c.h.b16 %v931
    %v1584 = vunpack.c.l.b16 %v932
    %v1585 = vunpack.c.h.b16 %v932
    %v1586 = vunpack.c.l.b16 %v933
    %v1587 = vunpack.c.h.b16 %v933
    %v1588 = vunpack.c.l.b16 %v934
    %v1589 = vunpack.c.l.b16 %v935
    %v1590 = vunpack.c.h.b16 %v935
    %v1591 = vunpack.c.l.b16 %v936
    %v1592 = vunpack.c.h.b16 %v936
    %v1593 = vunpack.c.l.b16 %v937
    %v1594 = vunpack.c.h.b16 %v937
    %v1595 = vunpack.c.l.b16 %v938
    %v1596 = vunpack.c.l.b16 %v939
    %v1597 = vunpack.c.h.b16 %v939
    %v1598 = vunpack.c.l.b16 %v940
    %v1599 = vunpack.c.h.b16 %v940
    %v1600 = vunpack.c.l.b16 %v941
    %v1601 = vunpack.c.h.b16 %v941
    %v1602 = vunpack.c.l.b16 %v942
    %v1603 = vunpack.c.l.b16 %v943
    %v1604 = vunpack.c.h.b16 %v943
    %v1605 = vunpack.c.l.b16 %v944
    %v1606 = vunpack.c.h.b16 %v944
    %v1607 = vunpack.c.l.b16 %v945
    %v1608 = vunpack.c.h.b16 %v945
    %v1609 = vunpack.c.l.b16 %v946
    %v1610 = vunpack.c.l.b16 %v947
    %v1611 = vunpack.c.h.b16 %v947
    %v1612 = vunpack.c.l.b16 %v948
    %v1613 = vunpack.c.h.b16 %v948
    %v1614 = vunpack.c.l.b16 %v949
    %v1615 = vunpack.c.h.b16 %v949
    %v1616 = vunpack.c.l.b16 %v950
    %v1617 = vunpack.c.l.b16 %v951
    %v1618 = vunpack.c.h.b16 %v951
    %v1619 = vunpack.c.l.b16 %v952
    %v1620 = vunpack.c.h.b16 %v952
    %v1621 = vunpack.c.l.b16 %v953
    %v1622 = vunpack.c.h.b16 %v953
    %v1623 = vunpack.c.l.b16 %v954
    %v1624 = vunpack.c.l.b16 %v955
    %v1625 = vunpack.c.h.b16 %v955
    %v1626 = vunpack.c.l.b16 %v956
    %v1627 = vunpack.c.h.b16 %v956
    %v1628 = vunpack.c.l.b16 %v957
    %v1629 = vunpack.c.h.b16 %v957
    %v1630 = vunpack.c.l.b16 %v958
    %v1631 = vunpack.c.l.b16 %v959
    %v1632 = vunpack.c.h.b16 %v959
    %v1633 = vunpack.c.l.b16 %v960
    %v1634 = vunpack.c.h.b16 %v960
    %v1635 = vunpack.c.l.b16 %v961
    %v1636 = vunpack.c.h.b16 %v961
    %v1637 = vunpack.c.l.b16 %v962
    %v1638 = vunpack.c.l.b16 %v963
    %v1639 = vunpack.c.h.b16 %v963
    %v1640 = vunpack.c.l.b16 %v964
    %v1641 = vunpack.c.h.b16 %v964
    %v1642 = vunpack.c.l.b16 %v965
    %v1643 = vunpack.c.h.b16 %v965
    %v1644 = vunpack.c.l.b16 %v966
    %v1645 = vunpack.c.l.b16 %v967
    %v1646 = vunpack.c.h.b16 %v967
    %v1647 = vunpack.c.l.b16 %v968
    %v1648 = vunpack.c.h.b16 %v968
    %v1649 = vunpack.c.l.b16 %v969
    %v1650 = vunpack.c.h.b16 %v969
    %v1651 = vunpack.c.l.b16 %v970
    %v1652 = vunpack.c.l.b16 %v971
    %v1653 = vunpack.c.h.b16 %v971
    %v1654 = vunpack.c.l.b16 %v972
    %v1655 = vunpack.c.h.b16 %v972
    %v1656 = vunpack.c.l.b16 %v973
    %v1657 = vunpack.c.h.b16 %v973
    %v1658 = vunpack.c.l.b16 %v974
    %v1659 = vunpack.c.l.b16 %v975
    %v1660 = vunpack.c.h.b16 %v975
    %v1661 = vunpack.c.l.b16 %v976
    %v1662 = vunpack.c.h.b16 %v976
    %v1663 = vunpack.c.l.b16 %v977
    %v1664 = vunpack.c.h.b16 %v977
    %v1665 = vunpack.c.l.b16 %v978
    %v1666 = vunpack.c.l.b16 %v979
    %v1667 = vunpack.c.h.b16 %v979
    %v1668 = vunpack.c.l.b16 %v980
    %v1669 = vunpack.c.h.b16 %v980
    %v1670 = vunpack.c.l.b16 %v981
    %v1671 = vunpack.c.h.b16 %v981
    %v1672 = vunpack.c.l.b16 %v982
    %v1673 = vunpack.c.l.b16 %v983
    %v1674 = vunpack.c.h.b16 %v983
    %v1675 = vunpack.c.l.b16 %v984
    %v1676 = vunpack.c.h.b16 %v984
    %v1677 = vunpack.c.l.b16 %v985
    %v1678 = vunpack.c.h.b16 %v985
    %v1679 = vunpack.c.l.b16 %v986
    %v1680 = vunpack.c.l.b16 %v987
    %v1681 = vunpack.c.h.b16 %v987
    %v1682 = vunpack.c.l.b16 %v988
    %v1683 = vunpack.c.h.b16 %v988
    %v1684 = vunpack.c.l.b16 %v989
    %v1685 = vunpack.c.h.b16 %v989
    %v1686 = vunpack.c.l.b16 %v990
    %v1687 = vunpack.c.l.b16 %v991
    %v1688 = vunpack.c.h.b16 %v991
    %v1689 = vunpack.c.l.b16 %v992
    %v1690 = vunpack.c.h.b16 %v992
    %v1691 = vunpack.c.l.b16 %v993
    %v1692 = vunpack.c.h.b16 %v993
    %v1693 = vunpack.c.l.b16 %v994
    %v1694 = vunpack.c.l.b16 %v995
    %v1695 = vunpack.c.h.b16 %v995
    %v1696 = vunpack.c.l.b16 %v996
    %v1697 = vunpack.c.h.b16 %v996
    %v1698 = vunpack.c.l.b16 %v997
    %v1699 = vunpack.c.h.b16 %v997
    %v1700 = vunpack.c.l.b16 %v998
    %v1701 = vunpack.c.l.b16 %v999
    %v1702 = vunpack.c.h.b16 %v999
    %v1703 = vunpack.c.l.b16 %v1000
    %v1704 = vunpack.c.h.b16 %v1000
    %v1705 = vunpack.c.l.b16 %v1001
    %v1706 = vunpack.c.h.b16 %v1001
    %v1707 = vunpack.c.l.b16 %v1002
    %v1708 = vunpack.c.l.b16 %v1003
    %v1709 = vunpack.c.h.b16 %v1003
    %v1710 = vunpack.c.l.b16 %v1004
    %v1711 = vunpack.c.h.b16 %v1004
    %v1712 = vunpack.c.l.b16 %v1005
    %v1713 = vunpack.c.h.b16 %v1005
    %v1714 = vunpack.c.l.b16 %v1006
    %v1715 = vunpack.c.l.b16 %v1007
    %v1716 = vunpack.c.h.b16 %v1007
    %v1717 = vunpack.c.l.b16 %v1008
    %v1718 = vunpack.c.h.b16 %v1008
    %v1719 = vunpack.c.l.b16 %v1009
    %v1720 = vunpack.c.h.b16 %v1009
    %v1721 = vunpack.c.l.b16 %v1010
    %v1722 = vunpack.c.l.b16 %v1011
    %v1723 = vunpack.c.h.b16 %v1011
    %v1724 = vunpack.c.l.b16 %v1012
    %v1725 = vunpack.c.h.b16 %v1012
    %v1726 = vunpack.c.l.b16 %v1013
    %v1727 = vunpack.c.h.b16 %v1013
    %v1728 = vunpack.c.l.b16 %v1014
    %v1729 = vunpack.c.l.b16 %v1015
    %v1730 = vunpack.c.h.b16 %v1015
    %v1731 = vunpack.c.l.b16 %v1016
    %v1732 = vunpack.c.h.b16 %v1016
    %v1733 = vunpack.c.l.b16 %v1017
    %v1734 = vunpack.c.h.b16 %v1017
    %v1735 = vunpack.c.l.b16 %v1018
    %v1736 = vunpack.c.l.b16 %v1019
    %v1737 = vunpack.c.h.b16 %v1019
    %v1738 = vunpack.c.l.b16 %v1020
    %v1739 = vunpack.c.h.b16 %v1020
    %v1740 = vunpack.c.l.b16 %v1021
    %v1741 = vunpack.c.h.b16 %v1021
    %v1742 = vunpack.c.l.b16 %v1022
    %v1743 = vpack.c.b16 %v1302, %v1295
    %v1744 = vpack.c.b16 %v1303, %v1296
    %v1745 = vpack.c.b16 %v1304, %v1297
    %v1746 = vpack.c.b16 %v1305, %v1298
    %v1747 = vpack.c.b16 %v1306, %v1299
    %v1748 = vpack.c.b16 %v1307, %v1300
    %v1749 = vpack.c.b16 %v1308, %v1301
    %v1750 = vpack.c.b16 %v1316, %v1309
    %v1751 = vpack.c.b16 %v1317, %v1310
    %v1752 = vpack.c.b16 %v1318, %v1311
    %v1753 = vpack.c.b16 %v1319, %v1312
    %v1754 = vpack.c.b16 %v1320, %v1313
    %v1755 = vpack.c.b16 %v1321, %v1314
    %v1756 = vpack.c.b16 %v1322, %v1315
    %v1757 = vpack.c.b16 %v1330, %v1323
    %v1758 = vpack.c.b16 %v1331, %v1324
    %v1759 = vpack.c.b16 %v1332, %v1325
    %v1760 = vpack.c.b16 %v1333, %v1326
    %v1761 = vpack.c.b16 %v1334, %v1327
    %v1762 = vpack.c.b16 %v1335, %v1328
    %v1763 = vpack.c.b16 %v1336, %v1329
    %v1764 = vpack.c.b16 %v1344, %v1337
    %v1765 = vpack.c.b16 %v1345, %v1338
    %v1766 = vpack.c.b16 %v1346, %v1339
    %v1767 = vpack.c.b16 %v1347, %v1340
    %v1768 = vpack.c.b16 %v1348, %v1341
    %v1769 = vpack.c.b16 %v1349, %v1342
    %v1770 = vpack.c.b16 %v1350, %v1343
    %v1771 = vpack.c.b16 %v1358, %v1351
    %v1772 = vpack.c.b16 %v1359, %v1352
    %v1773 = vpack.c.b16 %v1360, %v1353
    %v1774 = vpack.c.b16 %v1361, %v1354
    %v1775 = vpack.c.b16 %v1362, %v1355
    %v1776 = vpack.c.b16 %v1363, %v1356
    %v1777 = vpack.c.b16 %v1364, %v1357
    %v1778 = vpack.c.b16 %v1372, %v1365
    %v1779 = vpack.c.b16 %v1373, %v1366
    %v1780 = vpack.c.b16 %v1374, %v1367
    %v1781 = vpack.c.b16 %v1375, %v1368
    %v1782 = vpack.c.b16 %v1376, %v1369
    %v1783 = vpack.c.b16 %v1377, %v1370
    %v1784 = vpack.c.b16 %v1378, %v1371
    %v1785 = vpack.c.b16 %v1386, %v1379
    %v1786 = vpack.c.b16 %v1387, %v1380
    %v1787 = vpack.c.b16 %v1388, %v1381
    %v1788 = vpack.c.b16 %v1389, %v1382
    %v1789 = vpack.c.b16 %v1390, %v1383
    %v1790 = vpack.c.b16 %v1391, %v1384
    %v1791 = vpack.c.b16 %v1392, %v1385
    %v1792 = vpack.c.b16 %v1400, %v1393
    %v1793 = vpack.c.b16 %v1401, %v1394
    %v1794 = vpack.c.b16 %v1402, %v1395
    %v1795 = vpack.c.b16 %v1403, %v1396
    %v1796 = vpack.c.b16 %v1404, %v1397
    %v1797 = vpack.c.b16 %v1405, %v1398
    %v1798 = vpack.c.b16 %v1406, %v1399
    %v1799 = vpack.c.b16 %v1414, %v1407
    %v1800 = vpack.c.b16 %v1415, %v1408
    %v1801 = vpack.c.b16 %v1416, %v1409
    %v1802 = vpack.c.b16 %v1417, %v1410
    %v1803 = vpack.c.b16 %v1418, %v1411
    %v1804 = vpack.c.b16 %v1419, %v1412
    %v1805 = vpack.c.b16 %v1420, %v1413
    %v1806 = vpack.c.b16 %v1428, %v1421
    %v1807 = vpack.c.b16 %v1429, %v1422
    %v1808 = vpack.c.b16 %v1430, %v1423
    %v1809 = vpack.c.b16 %v1431, %v1424
    %v1810 = vpack.c.b16 %v1432, %v1425
    %v1811 = vpack.c.b16 %v1433, %v1426
    %v1812 = vpack.c.b16 %v1434, %v1427
    %v1813 = vpack.c.b16 %v1442, %v1435
    %v1814 = vpack.c.b16 %v1443, %v1436
    %v1815 = vpack.c.b16 %v1444, %v1437
    %v1816 = vpack.c.b16 %v1445, %v1438
    %v1817 = vpack.c.b16 %v1446, %v1439
    %v1818 = vpack.c.b16 %v1447, %v1440
    %v1819 = vpack.c.b16 %v1448, %v1441
    %v1820 = vpack.c.b16 %v1456, %v1449
    %v1821 = vpack.c.b16 %v1457, %v1450
    %v1822 = vpack.c.b16 %v1458, %v1451
    %v1823 = vpack.c.b16 %v1459, %v1452
    %v1824 = vpack.c.b16 %v1460, %v1453
    %v1825 = vpack.c.b16 %v1461, %v1454
    %v1826 = vpack.c.b16 %v1462, %v1455
    %v1827 = vpack.c.b16 %v1470, %v1463
    %v1828 = vpack.c.b16 %v1471, %v1464
    %v1829 = vpack.c.b16 %v1472, %v1465
    %v1830 = vpack.c.b16 %v1473, %v1466
    %v1831 = vpack.c.b16 %v1474, %v1467
    %v1832 = vpack.c.b16 %v1475, %v1468
    %v1833 = vpack.c.b16 %v1476, %v1469
    %v1834 = vpack.c.b16 %v1484, %v1477
    %v1835 = vpack.c.b16 %v1485, %v1478
    %v1836 = vpack.c.b16 %v1486, %v1479
    %v1837 = vpack.c.b16 %v1487, %v1480
    %v1838 = vpack.c.b16 %v1488, %v1481
    %v1839 = vpack.c.b16 %v1489, %v1482
    %v1840 = vpack.c.b16 %v1490, %v1483
    %v1841 = vpack.c.b16 %v1498, %v1491
    %v1842 = vpack.c.b16 %v1499, %v1492
    %v1843 = vpack.c.b16 %v1500, %v1493
    %v1844 = vpack.c.b16 %v1501, %v1494
    %v1845 = vpack.c.b16 %v1502, %v1495
    %v1846 = vpack.c.b16 %v1503, %v1496
    %v1847 = vpack.c.b16 %v1504, %v1497
    %v1848 = vpack.c.b16 %v1512, %v1505
    %v1849 = vpack.c.b16 %v1513, %v1506
    %v1850 = vpack.c.b16 %v1514, %v1507
    %v1851 = vpack.c.b16 %v1515, %v1508
    %v1852 = vpack.c.b16 %v1516, %v1509
    %v1853 = vpack.c.b16 %v1517, %v1510
    %v1854 = vpack.c.b16 %v1518, %v1511
    %v1855 = vpack.c.b16 %v1526, %v1519
    %v1856 = vpack.c.b16 %v1527, %v1520
    %v1857 = vpack.c.b16 %v1528, %v1521
    %v1858 = vpack.c.b16 %v1529, %v1522
    %v1859 = vpack.c.b16 %v1530, %v1523
    %v1860 = vpack.c.b16 %v1531, %v1524
    %v1861 = vpack.c.b16 %v1532, %v1525
    %v1862 = vpack.c.b16 %v1540, %v1533
    %v1863 = vpack.c.b16 %v1541, %v1534
    %v1864 = vpack.c.b16 %v1542, %v1535
    %v1865 = vpack.c.b16 %v1543, %v1536
    %v1866 = vpack.c.b16 %v1544, %v1537
    %v1867 = vpack.c.b16 %v1545, %v1538
    %v1868 = vpack.c.b16 %v1546, %v1539
    %v1869 = vpack.c.b16 %v1554, %v1547
    %v1870 = vpack.c.b16 %v1555, %v1548
    %v1871 = vpack.c.b16 %v1556, %v1549
    %v1872 = vpack.c.b16 %v1557, %v1550
    %v1873 = vpack.c.b16 %v1558, %v1551
    %v1874 = vpack.c.b16 %v1559, %v1552
    %v1875 = vpack.c.b16 %v1560, %v1553
    %v1876 = vpack.c.b16 %v1568, %v1561
    %v1877 = vpack.c.b16 %v1569, %v1562
    %v1878 = vpack.c.b16 %v1570, %v1563
    %v1879 = vpack.c.b16 %v1571, %v1564
    %v1880 = vpack.c.b16 %v1572, %v1565
    %v1881 = vpack.c.b16 %v1573, %v1566
    %v1882 = vpack.c.b16 %v1574, %v1567
    %v1883 = vpack.c.b16 %v1582, %v1575
    %v1884 = vpack.c.b16 %v1583, %v1576
    %v1885 = vpack.c.b16 %v1584, %v1577
    %v1886 = vpack.c.b16 %v1585, %v1578
    %v1887 = vpack.c.b16 %v1586, %v1579
    %v1888 = vpack.c.b16 %v1587, %v1580
    %v1889 = vpack.c.b16 %v1588, %v1581
    %v1890 = vpack.c.b16 %v1596, %v1589
    %v1891 = vpack.c.b16 %v1597, %v1590
    %v1892 = vpack.c.b16 %v1598, %v1591
    %v1893 = vpack.c.b16 %v1599, %v1592
    %v1894 = vpack.c.b16 %v1600, %v1593
    %v1895 = vpack.c.b16 %v1601, %v1594
    %v1896 = vpack.c.b16 %v1602, %v1595
    %v1897 = vpack.c.b16 %v1610, %v1603
    %v1898 = vpack.c.b16 %v1611, %v1604
    %v1899 = vpack.c.b16 %v1612, %v1605
    %v1900 = vpack.c.b16 %v1613, %v1606
    %v1901 = vpack.c.b16 %v1614, %v1607
    %v1902 = vpack.c.b16 %v1615, %v1608
    %v1903 = vpack.c.b16 %v1616, %v1609
    %v1904 = vpack.c.b16 %v1624, %v1617
    %v1905 = vpack.c.b16 %v1625, %v1618
    %v1906 = vpack.c.b16 %v1626, %v1619
    %v1907 = vpack.c.b16 %v1627, %v1620
    %v1908 = vpack.c.b16 %v1628, %v1621
    %v1909 = vpack.c.b16 %v1629, %v1622
    %v1910 = vpack.c.b16 %v1630, %v1623
    %v1911 = vpack.c.b16 %v1638, %v1631
    %v1912 = vpack.c.b16 %v1639, %v1632
    %v1913 = vpack.c.b16 %v1640, %v1633
    %v1914 = vpack.c.b16 %v1641, %v1634
    %v1915 = vpack.c.b16 %v1642, %v1635
    %v1916 = vpack.c.b16 %v1643, %v1636
    %v1917 = vpack.c.b16 %v1644, %v1637
    %v1918 = vpack.c.b16 %v1652, %v1645
    %v1919 = vpack.c.b16 %v1653, %v1646
    %v1920 = vpack.c.b16 %v1654, %v1647
    %v1921 = vpack.c.b16 %v1655, %v1648
    %v1922 = vpack.c.b16 %v1656, %v1649
    %v1923 = vpack.c.b16 %v1657, %v1650
    %v1924 = vpack.c.b16 %v1658, %v1651
    %v1925 = vpack.c.b16 %v1666, %v1659
    %v1926 = vpack.c.b16 %v1667, %v1660
    %v1927 = vpack.c.b16 %v1668, %v1661
    %v1928 = vpack.c.b16 %v1669, %v1662
    %v1929 = vpack.c.b16 %v1670, %v1663
    %v1930 = vpack.c.b16 %v1671, %v1664
    %v1931 = vpack.c.b16 %v1672, %v1665
    %v1932 = vpack.c.b16 %v1680, %v1673
    %v1933 = vpack.c.b16 %v1681, %v1674
    %v1934 = vpack.c.b16 %v1682, %v1675
    %v1935 = vpack.c.b16 %v1683, %v1676
    %v1936 = vpack.c.b16 %v1684, %v1677
    %v1937 = vpack.c.b16 %v1685, %v1678
    %v1938 = vpack.c.b16 %v1686, %v1679
    %v1939 = vpack.c.b16 %v1694, %v1687
    %v1940 = vpack.c.b16 %v1695, %v1688
    %v1941 = vpack.c.b16 %v1696, %v1689
    %v1942 = vpack.c.b16 %v1697, %v1690
    %v1943 = vpack.c.b16 %v1698, %v1691
    %v1944 = vpack.c.b16 %v1699, %v1692
    %v1945 = vpack.c.b16 %v1700, %v1693
    %v1946 = vpack.c.b16 %v1708, %v1701
    %v1947 = vpack.c.b16 %v1709, %v1702
    %v1948 = vpack.c.b16 %v1710, %v1703
    %v1949 = vpack.c.b16 %v1711, %v1704
    %v1950 = vpack.c.b16 %v1712, %v1705
    %v1951 = vpack.c.b16 %v1713, %v1706
    %v1952 = vpack.c.b16 %v1714, %v1707
    %v1953 = vpack.c.b16 %v1722, %v1715
    %v1954 = vpack.c.b16 %v1723, %v1716
    %v1955 = vpack.c.b16 %v1724, %v1717
    %v1956 = vpack.c.b16 %v1725, %v1718
    %v1957 = vpack.c.b16 %v1726, %v1719
    %v1958 = vpack.c.b16 %v1727, %v1720
    %v1959 = vpack.c.b16 %v1728, %v1721
    %v1960 = vpack.c.b16 %v1736, %v1729
    %v1961 = vpack.c.b16 %v1737, %v1730
    %v1962 = vpack.c.b16 %v1738, %v1731
    %v1963 = vpack.c.b16 %v1739, %v1732
    %v1964 = vpack.c.b16 %v1740, %v1733
    %v1965 = vpack.c.b16 %v1741, %v1734
    %v1966 = vpack.c.b16 %v1742, %v1735
    %2191 = vmatpush.bf16.msra.mxu0 %v1792
    %2192 = vmatpush.bf16.msra.mxu0 %v1785
    %2193 = vmatpush.bf16.msra.mxu0 %v1778
    %2194 = vmatpush.bf16.msra.mxu0 %v1771
    %2195 = vmatpush.bf16.msra.mxu0 %v1764
    %2196 = vmatpush.bf16.msra.mxu0 %v1757
    %2197 = vmatpush.bf16.msra.mxu0 %v1750
    %2198 = vmatpush.bf16.msra.mxu0 %v1743
    %2199 = vmatmul.bf16.gmra.mxu0 %v763
    %v2200 = vpop.f32.mrf.mxu0
    %v2201 = vadd.f32 %v1025, %v2200
    %v2202 = vpop.f32.mrf.mxu0
    %2203 = vdwg.mxu0
    %2204 = vmatpush.bf16.msra.mxu0 %v1848
    %2205 = vmatpush.bf16.msra.mxu0 %v1841
    %2206 = vmatpush.bf16.msra.mxu0 %v1834
    %2207 = vmatpush.bf16.msra.mxu0 %v1827
    %2208 = vmatpush.bf16.msra.mxu0 %v1820
    %2209 = vmatpush.bf16.msra.mxu0 %v1813
    %2210 = vmatpush.bf16.msra.mxu0 %v1806
    %2211 = vmatpush.bf16.msra.mxu0 %v1799
    %2212 = vmatmul.bf16.gmra.mxu0 %v764
    %v2213 = vpop.f32.mrf.mxu0
    %v2214 = vadd.f32 %v2201, %v2213
    %v2215 = vpop.f32.mrf.mxu0
    %2216 = vdwg.mxu0
    %2217 = vmatpush.bf16.msra.mxu0 %v1904
    %2218 = vmatpush.bf16.msra.mxu0 %v1897
    %2219 = vmatpush.bf16.msra.mxu0 %v1890
    %2220 = vmatpush.bf16.msra.mxu0 %v1883
    %2221 = vmatpush.bf16.msra.mxu0 %v1876
    %2222 = vmatpush.bf16.msra.mxu0 %v1869
    %2223 = vmatpush.bf16.msra.mxu0 %v1862
    %2224 = vmatpush.bf16.msra.mxu0 %v1855
    %2225 = vmatmul.bf16.gmra.mxu0 %v765
    %v2226 = vpop.f32.mrf.mxu0
    %v2227 = vadd.f32 %v2214, %v2226
    %v2228 = vpop.f32.mrf.mxu0
    %2229 = vdwg.mxu0
    %2230 = vmatpush.bf16.msra.mxu0 %v1960
    %2231 = vmatpush.bf16.msra.mxu0 %v1953
    %2232 = vmatpush.bf16.msra.mxu0 %v1946
    %2233 = vmatpush.bf16.msra.mxu0 %v1939
    %2234 = vmatpush.bf16.msra.mxu0 %v1932
    %2235 = vmatpush.bf16.msra.mxu0 %v1925
    %2236 = vmatpush.bf16.msra.mxu0 %v1918
    %2237 = vmatpush.bf16.msra.mxu0 %v1911
    %2238 = vmatmul.bf16.gmra.mxu0 %v766
    %v2239 = vpop.f32.mrf.mxu0
    %v2240 = vadd.f32 %v2227, %v2239
    %v2241 = vpop.f32.mrf.mxu0
    %2242 = vdwg.mxu0
    %2243 = vmatpush.bf16.msra.mxu0 %v1793
    %2244 = vmatpush.bf16.msra.mxu0 %v1786
    %2245 = vmatpush.bf16.msra.mxu0 %v1779
    %2246 = vmatpush.bf16.msra.mxu0 %v1772
    %2247 = vmatpush.bf16.msra.mxu0 %v1765
    %2248 = vmatpush.bf16.msra.mxu0 %v1758
    %2249 = vmatpush.bf16.msra.mxu0 %v1751
    %2250 = vmatpush.bf16.msra.mxu0 %v1744
    %2251 = vmatmul.bf16.gmra.mxu0 %v763
    %v2252 = vpop.f32.mrf.mxu0
    %v2253 = vadd.f32 %v1026, %v2252
    %v2254 = vpop.f32.mrf.mxu0
    %2255 = vdwg.mxu0
    %2256 = vmatpush.bf16.msra.mxu0 %v1849
    %2257 = vmatpush.bf16.msra.mxu0 %v1842
    %2258 = vmatpush.bf16.msra.mxu0 %v1835
    %2259 = vmatpush.bf16.msra.mxu0 %v1828
    %2260 = vmatpush.bf16.msra.mxu0 %v1821
    %2261 = vmatpush.bf16.msra.mxu0 %v1814
    %2262 = vmatpush.bf16.msra.mxu0 %v1807
    %2263 = vmatpush.bf16.msra.mxu0 %v1800
    %2264 = vmatmul.bf16.gmra.mxu0 %v764
    %v2265 = vpop.f32.mrf.mxu0
    %v2266 = vadd.f32 %v2253, %v2265
    %v2267 = vpop.f32.mrf.mxu0
    %2268 = vdwg.mxu0
    %2269 = vmatpush.bf16.msra.mxu0 %v1905
    %2270 = vmatpush.bf16.msra.mxu0 %v1898
    %2271 = vmatpush.bf16.msra.mxu0 %v1891
    %2272 = vmatpush.bf16.msra.mxu0 %v1884
    %2273 = vmatpush.bf16.msra.mxu0 %v1877
    %2274 = vmatpush.bf16.msra.mxu0 %v1870
    %2275 = vmatpush.bf16.msra.mxu0 %v1863
    %2276 = vmatpush.bf16.msra.mxu0 %v1856
    %2277 = vmatmul.bf16.gmra.mxu0 %v765
    %v2278 = vpop.f32.mrf.mxu0
    %v2279 = vadd.f32 %v2266, %v2278
    %v2280 = vpop.f32.mrf.mxu0
    %2281 = vdwg.mxu0
    %2282 = vmatpush.bf16.msra.mxu0 %v1961
    %2283 = vmatpush.bf16.msra.mxu0 %v1954
    %2284 = vmatpush.bf16.msra.mxu0 %v1947
    %2285 = vmatpush.bf16.msra.mxu0 %v1940
    %2286 = vmatpush.bf16.msra.mxu0 %v1933
    %2287 = vmatpush.bf16.msra.mxu0 %v1926
    %2288 = vmatpush.bf16.msra.mxu0 %v1919
    %2289 = vmatpush.bf16.msra.mxu0 %v1912
    %2290 = vmatmul.bf16.gmra.mxu0 %v766
    %v2291 = vpop.f32.mrf.mxu0
    %v2292 = vadd.f32 %v2279, %v2291
    %v2293 = vpop.f32.mrf.mxu0
    %2294 = vdwg.mxu0
    %2295 = vmatpush.bf16.msra.mxu0 %v1794
    %2296 = vmatpush.bf16.msra.mxu0 %v1787
    %2297 = vmatpush.bf16.msra.mxu0 %v1780
    %2298 = vmatpush.bf16.msra.mxu0 %v1773
    %2299 = vmatpush.bf16.msra.mxu0 %v1766
    %2300 = vmatpush.bf16.msra.mxu0 %v1759
    %2301 = vmatpush.bf16.msra.mxu0 %v1752
    %2302 = vmatpush.bf16.msra.mxu0 %v1745
    %2303 = vmatmul.bf16.gmra.mxu0 %v763
    %v2304 = vpop.f32.mrf.mxu0
    %v2305 = vadd.f32 %v1027, %v2304
    %v2306 = vpop.f32.mrf.mxu0
    %2307 = vdwg.mxu0
    %2308 = vmatpush.bf16.msra.mxu0 %v1850
    %2309 = vmatpush.bf16.msra.mxu0 %v1843
    %2310 = vmatpush.bf16.msra.mxu0 %v1836
    %2311 = vmatpush.bf16.msra.mxu0 %v1829
    %2312 = vmatpush.bf16.msra.mxu0 %v1822
    %2313 = vmatpush.bf16.msra.mxu0 %v1815
    %2314 = vmatpush.bf16.msra.mxu0 %v1808
    %2315 = vmatpush.bf16.msra.mxu0 %v1801
    %2316 = vmatmul.bf16.gmra.mxu0 %v764
    %v2317 = vpop.f32.mrf.mxu0
    %v2318 = vadd.f32 %v2305, %v2317
    %v2319 = vpop.f32.mrf.mxu0
    %2320 = vdwg.mxu0
    %2321 = vmatpush.bf16.msra.mxu0 %v1906
    %2322 = vmatpush.bf16.msra.mxu0 %v1899
    %2323 = vmatpush.bf16.msra.mxu0 %v1892
    %2324 = vmatpush.bf16.msra.mxu0 %v1885
    %2325 = vmatpush.bf16.msra.mxu0 %v1878
    %2326 = vmatpush.bf16.msra.mxu0 %v1871
    %2327 = vmatpush.bf16.msra.mxu0 %v1864
    %2328 = vmatpush.bf16.msra.mxu0 %v1857
    %2329 = vmatmul.bf16.gmra.mxu0 %v765
    %v2330 = vpop.f32.mrf.mxu0
    %v2331 = vadd.f32 %v2318, %v2330
    %v2332 = vpop.f32.mrf.mxu0
    %2333 = vdwg.mxu0
    %2334 = vmatpush.bf16.msra.mxu0 %v1962
    %2335 = vmatpush.bf16.msra.mxu0 %v1955
    %2336 = vmatpush.bf16.msra.mxu0 %v1948
    %2337 = vmatpush.bf16.msra.mxu0 %v1941
    %2338 = vmatpush.bf16.msra.mxu0 %v1934
    %2339 = vmatpush.bf16.msra.mxu0 %v1927
    %2340 = vmatpush.bf16.msra.mxu0 %v1920
    %2341 = vmatpush.bf16.msra.mxu0 %v1913
    %2342 = vmatmul.bf16.gmra.mxu0 %v766
    %v2343 = vpop.f32.mrf.mxu0
    %v2344 = vadd.f32 %v2331, %v2343
    %v2345 = vpop.f32.mrf.mxu0
    %2346 = vdwg.mxu0
    %2347 = vmatpush.bf16.msra.mxu0 %v1795
    %2348 = vmatpush.bf16.msra.mxu0 %v1788
    %2349 = vmatpush.bf16.msra.mxu0 %v1781
    %2350 = vmatpush.bf16.msra.mxu0 %v1774
    %2351 = vmatpush.bf16.msra.mxu0 %v1767
    %2352 = vmatpush.bf16.msra.mxu0 %v1760
    %2353 = vmatpush.bf16.msra.mxu0 %v1753
    %2354 = vmatpush.bf16.msra.mxu0 %v1746
    %2355 = vmatmul.bf16.gmra.mxu0 %v763
    %v2356 = vpop.f32.mrf.mxu0
    %v2357 = vadd.f32 %v1028, %v2356
    %v2358 = vpop.f32.mrf.mxu0
    %2359 = vdwg.mxu0
    %2360 = vmatpush.bf16.msra.mxu0 %v1851
    %2361 = vmatpush.bf16.msra.mxu0 %v1844
    %2362 = vmatpush.bf16.msra.mxu0 %v1837
    %2363 = vmatpush.bf16.msra.mxu0 %v1830
    %2364 = vmatpush.bf16.msra.mxu0 %v1823
    %2365 = vmatpush.bf16.msra.mxu0 %v1816
    %2366 = vmatpush.bf16.msra.mxu0 %v1809
    %2367 = vmatpush.bf16.msra.mxu0 %v1802
    %2368 = vmatmul.bf16.gmra.mxu0 %v764
    %v2369 = vpop.f32.mrf.mxu0
    %v2370 = vadd.f32 %v2357, %v2369
    %v2371 = vpop.f32.mrf.mxu0
    %2372 = vdwg.mxu0
    %2373 = vmatpush.bf16.msra.mxu0 %v1907
    %2374 = vmatpush.bf16.msra.mxu0 %v1900
    %2375 = vmatpush.bf16.msra.mxu0 %v1893
    %2376 = vmatpush.bf16.msra.mxu0 %v1886
    %2377 = vmatpush.bf16.msra.mxu0 %v1879
    %2378 = vmatpush.bf16.msra.mxu0 %v1872
    %2379 = vmatpush.bf16.msra.mxu0 %v1865
    %2380 = vmatpush.bf16.msra.mxu0 %v1858
    %2381 = vmatmul.bf16.gmra.mxu0 %v765
    %v2382 = vpop.f32.mrf.mxu0
    %v2383 = vadd.f32 %v2370, %v2382
    %v2384 = vpop.f32.mrf.mxu0
    %2385 = vdwg.mxu0
    %2386 = vmatpush.bf16.msra.mxu0 %v1963
    %2387 = vmatpush.bf16.msra.mxu0 %v1956
    %2388 = vmatpush.bf16.msra.mxu0 %v1949
    %2389 = vmatpush.bf16.msra.mxu0 %v1942
    %2390 = vmatpush.bf16.msra.mxu0 %v1935
    %2391 = vmatpush.bf16.msra.mxu0 %v1928
    %2392 = vmatpush.bf16.msra.mxu0 %v1921
    %2393 = vmatpush.bf16.msra.mxu0 %v1914
    %2394 = vmatmul.bf16.gmra.mxu0 %v766
    %v2395 = vpop.f32.mrf.mxu0
    %v2396 = vadd.f32 %v2383, %v2395
    %v2397 = vpop.f32.mrf.mxu0
    %2398 = vdwg.mxu0
    %2399 = vmatpush.bf16.msra.mxu0 %v1796
    %2400 = vmatpush.bf16.msra.mxu0 %v1789
    %2401 = vmatpush.bf16.msra.mxu0 %v1782
    %2402 = vmatpush.bf16.msra.mxu0 %v1775
    %2403 = vmatpush.bf16.msra.mxu0 %v1768
    %2404 = vmatpush.bf16.msra.mxu0 %v1761
    %2405 = vmatpush.bf16.msra.mxu0 %v1754
    %2406 = vmatpush.bf16.msra.mxu0 %v1747
    %2407 = vmatmul.bf16.gmra.mxu0 %v763
    %v2408 = vpop.f32.mrf.mxu0
    %v2409 = vadd.f32 %v1029, %v2408
    %v2410 = vpop.f32.mrf.mxu0
    %2411 = vdwg.mxu0
    %2412 = vmatpush.bf16.msra.mxu0 %v1852
    %2413 = vmatpush.bf16.msra.mxu0 %v1845
    %2414 = vmatpush.bf16.msra.mxu0 %v1838
    %2415 = vmatpush.bf16.msra.mxu0 %v1831
    %2416 = vmatpush.bf16.msra.mxu0 %v1824
    %2417 = vmatpush.bf16.msra.mxu0 %v1817
    %2418 = vmatpush.bf16.msra.mxu0 %v1810
    %2419 = vmatpush.bf16.msra.mxu0 %v1803
    %2420 = vmatmul.bf16.gmra.mxu0 %v764
    %v2421 = vpop.f32.mrf.mxu0
    %v2422 = vadd.f32 %v2409, %v2421
    %v2423 = vpop.f32.mrf.mxu0
    %2424 = vdwg.mxu0
    %2425 = vmatpush.bf16.msra.mxu0 %v1908
    %2426 = vmatpush.bf16.msra.mxu0 %v1901
    %2427 = vmatpush.bf16.msra.mxu0 %v1894
    %2428 = vmatpush.bf16.msra.mxu0 %v1887
    %2429 = vmatpush.bf16.msra.mxu0 %v1880
    %2430 = vmatpush.bf16.msra.mxu0 %v1873
    %2431 = vmatpush.bf16.msra.mxu0 %v1866
    %2432 = vmatpush.bf16.msra.mxu0 %v1859
    %2433 = vmatmul.bf16.gmra.mxu0 %v765
    %v2434 = vpop.f32.mrf.mxu0
    %v2435 = vadd.f32 %v2422, %v2434
    %v2436 = vpop.f32.mrf.mxu0
    %2437 = vdwg.mxu0
    %2438 = vmatpush.bf16.msra.mxu0 %v1964
    %2439 = vmatpush.bf16.msra.mxu0 %v1957
    %2440 = vmatpush.bf16.msra.mxu0 %v1950
    %2441 = vmatpush.bf16.msra.mxu0 %v1943
    %2442 = vmatpush.bf16.msra.mxu0 %v1936
    %2443 = vmatpush.bf16.msra.mxu0 %v1929
    %2444 = vmatpush.bf16.msra.mxu0 %v1922
    %2445 = vmatpush.bf16.msra.mxu0 %v1915
    %2446 = vmatmul.bf16.gmra.mxu0 %v766
    %v2447 = vpop.f32.mrf.mxu0
    %v2448 = vadd.f32 %v2435, %v2447
    %v2449 = vpop.f32.mrf.mxu0
    %2450 = vdwg.mxu0
    %2451 = vmatpush.bf16.msra.mxu0 %v1797
    %2452 = vmatpush.bf16.msra.mxu0 %v1790
    %2453 = vmatpush.bf16.msra.mxu0 %v1783
    %2454 = vmatpush.bf16.msra.mxu0 %v1776
    %2455 = vmatpush.bf16.msra.mxu0 %v1769
    %2456 = vmatpush.bf16.msra.mxu0 %v1762
    %2457 = vmatpush.bf16.msra.mxu0 %v1755
    %2458 = vmatpush.bf16.msra.mxu0 %v1748
    %2459 = vmatmul.bf16.gmra.mxu0 %v763
    %v2460 = vpop.f32.mrf.mxu0
    %v2461 = vadd.f32 %v1030, %v2460
    %v2462 = vpop.f32.mrf.mxu0
    %2463 = vdwg.mxu0
    %2464 = vmatpush.bf16.msra.mxu0 %v1853
    %2465 = vmatpush.bf16.msra.mxu0 %v1846
    %2466 = vmatpush.bf16.msra.mxu0 %v1839
    %2467 = vmatpush.bf16.msra.mxu0 %v1832
    %2468 = vmatpush.bf16.msra.mxu0 %v1825
    %2469 = vmatpush.bf16.msra.mxu0 %v1818
    %2470 = vmatpush.bf16.msra.mxu0 %v1811
    %2471 = vmatpush.bf16.msra.mxu0 %v1804
    %2472 = vmatmul.bf16.gmra.mxu0 %v764
    %v2473 = vpop.f32.mrf.mxu0
    %v2474 = vadd.f32 %v2461, %v2473
    %v2475 = vpop.f32.mrf.mxu0
    %2476 = vdwg.mxu0
    %2477 = vmatpush.bf16.msra.mxu0 %v1909
    %2478 = vmatpush.bf16.msra.mxu0 %v1902
    %2479 = vmatpush.bf16.msra.mxu0 %v1895
    %2480 = vmatpush.bf16.msra.mxu0 %v1888
    %2481 = vmatpush.bf16.msra.mxu0 %v1881
    %2482 = vmatpush.bf16.msra.mxu0 %v1874
    %2483 = vmatpush.bf16.msra.mxu0 %v1867
    %2484 = vmatpush.bf16.msra.mxu0 %v1860
    %2485 = vmatmul.bf16.gmra.mxu0 %v765
    %v2486 = vpop.f32.mrf.mxu0
    %v2487 = vadd.f32 %v2474, %v2486
    %v2488 = vpop.f32.mrf.mxu0
    %2489 = vdwg.mxu0
    %2490 = vmatpush.bf16.msra.mxu0 %v1965
    %2491 = vmatpush.bf16.msra.mxu0 %v1958
    %2492 = vmatpush.bf16.msra.mxu0 %v1951
    %2493 = vmatpush.bf16.msra.mxu0 %v1944
    %2494 = vmatpush.bf16.msra.mxu0 %v1937
    %2495 = vmatpush.bf16.msra.mxu0 %v1930
    %2496 = vmatpush.bf16.msra.mxu0 %v1923
    %2497 = vmatpush.bf16.msra.mxu0 %v1916
    %2498 = vmatmul.bf16.gmra.mxu0 %v766
    %v2499 = vpop.f32.mrf.mxu0
    %v2500 = vadd.f32 %v2487, %v2499
    %v2501 = vpop.f32.mrf.mxu0
    %2502 = vdwg.mxu0
    %2503 = vmatpush.bf16.msra.mxu0 %v1798
    %2504 = vmatpush.bf16.msra.mxu0 %v1791
    %2505 = vmatpush.bf16.msra.mxu0 %v1784
    %2506 = vmatpush.bf16.msra.mxu0 %v1777
    %2507 = vmatpush.bf16.msra.mxu0 %v1770
    %2508 = vmatpush.bf16.msra.mxu0 %v1763
    %2509 = vmatpush.bf16.msra.mxu0 %v1756
    %2510 = vmatpush.bf16.msra.mxu0 %v1749
    %2511 = vmatmul.bf16.gmra.mxu0 %v763
    %v2512 = vpop.f32.mrf.mxu0
    %v2513 = vadd.f32 %v1031, %v2512
    %v2514 = vpop.f32.mrf.mxu0
    %2515 = vdwg.mxu0
    %2516 = vmatpush.bf16.msra.mxu0 %v1854
    %2517 = vmatpush.bf16.msra.mxu0 %v1847
    %2518 = vmatpush.bf16.msra.mxu0 %v1840
    %2519 = vmatpush.bf16.msra.mxu0 %v1833
    %2520 = vmatpush.bf16.msra.mxu0 %v1826
    %2521 = vmatpush.bf16.msra.mxu0 %v1819
    %2522 = vmatpush.bf16.msra.mxu0 %v1812
    %2523 = vmatpush.bf16.msra.mxu0 %v1805
    %2524 = vmatmul.bf16.gmra.mxu0 %v764
    %v2525 = vpop.f32.mrf.mxu0
    %v2526 = vadd.f32 %v2513, %v2525
    %v2527 = vpop.f32.mrf.mxu0
    %2528 = vdwg.mxu0
    %2529 = vmatpush.bf16.msra.mxu0 %v1910
    %2530 = vmatpush.bf16.msra.mxu0 %v1903
    %2531 = vmatpush.bf16.msra.mxu0 %v1896
    %2532 = vmatpush.bf16.msra.mxu0 %v1889
    %2533 = vmatpush.bf16.msra.mxu0 %v1882
    %2534 = vmatpush.bf16.msra.mxu0 %v1875
    %2535 = vmatpush.bf16.msra.mxu0 %v1868
    %2536 = vmatpush.bf16.msra.mxu0 %v1861
    %2537 = vmatmul.bf16.gmra.mxu0 %v765
    %v2538 = vpop.f32.mrf.mxu0
    %v2539 = vadd.f32 %v2526, %v2538
    %v2540 = vpop.f32.mrf.mxu0
    %2541 = vdwg.mxu0
    %2542 = vmatpush.bf16.msra.mxu0 %v1966
    %2543 = vmatpush.bf16.msra.mxu0 %v1959
    %2544 = vmatpush.bf16.msra.mxu0 %v1952
    %2545 = vmatpush.bf16.msra.mxu0 %v1945
    %2546 = vmatpush.bf16.msra.mxu0 %v1938
    %2547 = vmatpush.bf16.msra.mxu0 %v1931
    %2548 = vmatpush.bf16.msra.mxu0 %v1924
    %2549 = vmatpush.bf16.msra.mxu0 %v1917
    %2550 = vmatmul.bf16.gmra.mxu0 %v766
    %v2551 = vpop.f32.mrf.mxu0
    %v2552 = vadd.f32 %v2539, %v2551
    %v2553 = vpop.f32.mrf.mxu0
    %2554 = vdwg.mxu0
    %v2555 = vtanh.pop %v2240
    %v2556 = vtanh.pop %v2292
    %v2557 = vtanh.pop %v2344
    %v2558 = vtanh.pop %v2396
    %v2559 = vtanh.pop %v2448
    %v2560 = vtanh.pop %v2500
    %v2561 = vtanh.pop %v2552
    %v2562 = vpack.c.bf16 %v2556, %v2555
    %v2563 = vpack.c.bf16 %v2558, %v2557
    %v2564 = vpack.c.bf16 %v2560, %v2559
    %v2565 = vpack.c.bf16 %v2561, %v2561
    %2566 = vst [vmem:[#allocation14] sm:$0xff] %v2562
    %2567 = vst [vmem:[#allocation14 + $0x8] sm:$0xff] %v2563
    %2568 = vst [vmem:[#allocation14 + $0x10] sm:$0xff] %v2564
    %2569 = vst [vmem:[#allocation14 + $0x18] sm:$0xf] %v2565
    // Predicated region
    $region58: #{tpu_custom_call.1} parent=1 // pred_check
      _
    $region59: #{tpu_custom_call.1} parent=1 // pred_check_branch
      %2571 = sbr.rel (0) target = $region61
    $region60: #{tpu_custom_call.1} parent=1 // pred_region
      %2573 = vsyncadd [#allocation4], 0
      %s2575 = sshll.u32 [#allocation14], 4
      %s2576 = int_to_ptr.vmem [resolvable:$true] %s2575
      %s2577 = sshll.u32 %s7, 4
      %s2578 = int_to_ptr.hbm [resolvable:$true] %s2577
      %2580 = dma.vmem_to_hbm [thread:$0]  %s2576, 448, %s2578, [#allocation4]
    $region61: #{tpu_custom_call.1} parent=1 // pred_fallthru
      _
    // Predicated region
    $region62: #{tpu_custom_call.1} parent=1 // pred_check
      _
    $region63: #{tpu_custom_call.1} parent=1 // pred_check_branch
      %2582 = sbr.rel (0) target = $region65
    $region64: #{tpu_custom_call.1} parent=1 // pred_region
      %2584 = dma.done [#allocation4], 448
    $region65: #{tpu_custom_call.1} parent=1 // pred_fallthru
      _
    %2585 = vsyncpa [#allocation3], 1
    %2586 = vsyncpa [#allocation6], 1
    %2587 = vsyncpa [#allocation9], 1
    %2588 = vsyncpa [#allocation12], 1
    %2589 = vsyncpa [#allocation4], 1

</llo_original>
